<compile_context>
chip_gen: v5e
topology: v5e:2x2
jax: 0.10.0
libtpu: 0.0.40
codegen_flags: <defaults>
</compile_context>

<pallas_src>
import math
import functools

import numpy as np
import jax
import jax.numpy as jnp
from jax.experimental import pallas as pl
from jax.experimental.pallas import tpu as pltpu


def _pos_embed_kernel(y_ref, x_ref, ctab_ref, out_ref, *, F):
    # y_ref, x_ref: (1, 1, TILE_N)  flattened (normalized/scaled) y/x embeds
    # ctab_ref:     (F, 2)          col 0 = scale/dim_t, col 1 = phase (0 / pi/2)
    # out_ref:      (1, 2F, TILE_N)
    coeff = ctab_ref[:, 0:1]                         # (F, 1)
    phase = ctab_ref[:, 1:2]                         # (F, 1)
    y = y_ref[0]                                     # (1, TILE_N)
    x = x_ref[0]                                     # (1, TILE_N)
    # cos(t) == sin(t + pi/2): one mul-add + sin per half, fully lane-dense.
    out_ref[0, :F, :] = jnp.sin(y * coeff + phase)   # y-half -> channels [0, F)
    out_ref[0, F:, :] = jnp.sin(x * coeff + phase)   # x-half -> channels [F, 2F)


def _ceil_to(v, m):
    return -(-v // m) * m


def _choose_tile_n(B, N, C, target_bytes=4 << 20, min_grid_steps=4):
    """Tile of the flattened spatial axis: multiple of 128 lanes, ~target_bytes
    per (C, TILE_N) f32 output block, shrunk if the grid would be too coarse to
    pipeline / feed both v7x TensorCores."""
    n128 = _ceil_to(N, 128)
    tile = max(128, (target_bytes // (C * 4)) // 128 * 128)
    tile = min(tile, n128)
    while tile > 128 and B * (-(-n128 // tile)) < min_grid_steps:
        tile = max(128, (tile // 2) // 128 * 128)
    n_pad = _ceil_to(N, tile)
    return tile, n_pad


def position_embedding_sine(mask, num_pos_feats=64, temperature=10000,
                            normalize=False, scale=None):
    """mask: (B, H, W) bool, True = padded.  Returns (B, 2*num_pos_feats, H, W) f32."""
    if scale is not None and normalize is False:
        raise ValueError("normalize should be True if scale is passed")
    if scale is None:
        scale = 2 * math.pi

    B, H, W = mask.shape
    F = num_pos_feats
    C = 2 * F
    N = H * W
    eps = 1e-6

    # ---- tiny O(B*H*W) prep in plain XLA (~1/64 of the output traffic) ----
    not_mask = (~mask).astype(jnp.float32)
    y_embed = jnp.cumsum(not_mask, axis=1)
    x_embed = jnp.cumsum(not_mask, axis=2)
    if normalize:
        y_embed = y_embed / (y_embed[:, -1:, :] + eps)
        x_embed = x_embed / (x_embed[:, :, -1:] + eps)
        # the `* scale` factor is folded into the 1/dim_t table below

    tile_n, n_pad = _choose_tile_n(B, N, C)
    y_flat = y_embed.reshape(B, 1, N)
    x_flat = x_embed.reshape(B, 1, N)
    if n_pad > N:
        pad = ((0, 0), (0, 0), (0, n_pad - N))
        y_flat = jnp.pad(y_flat, pad)
        x_flat = jnp.pad(x_flat, pad)

    # ---- trace-time constants (numpy float64 for parity, cast to f32) ----
    d = np.arange(F, dtype=np.float64)
    inv_dim_t = float(temperature) ** (-2.0 * np.floor(d / 2.0) / float(F))  # 1/dim_t
    if normalize:
        inv_dim_t = inv_dim_t * float(scale)          # fold `* scale` into the table
    phase = (np.pi / 2.0) * (d % 2.0)                 # odd channel -> cos
    ctab = np.stack([inv_dim_t, phase], axis=1).astype(np.float32)   # (F, 2)

    n_tiles = n_pad // tile_n
    kernel = functools.partial(_pos_embed_kernel, F=F)

    out = pl.pallas_call(
        kernel,
        out_shape=jax.ShapeDtypeStruct((B, C, n_pad), jnp.float32),
        grid_spec=pltpu.PrefetchScalarGridSpec(
            num_scalar_prefetch=0,
            grid=(B, n_tiles),
            in_specs=[
                pl.BlockSpec((1, 1, tile_n), lambda b, t: (b, 0, t)),  # y_flat tile
                pl.BlockSpec((1, 1, tile_n), lambda b, t: (b, 0, t)),  # x_flat tile
                pl.BlockSpec((F, 2), lambda b, t: (0, 0)),             # const table (resident)
            ],
            out_specs=pl.BlockSpec((1, C, tile_n), lambda b, t: (b, 0, t)),
        ),
        compiler_params=pltpu.CompilerParams(
            dimension_semantics=("parallel", "parallel"),
            vmem_limit_bytes=32 * 1024 * 1024),
    )(y_flat, x_flat, jnp.asarray(ctab))

    if n_pad > N:
        out = out[:, :, :N]
    # (B, C, H*W) -> (B, C, H, W): layout-compatible reshape, no extra HBM traffic.
    return out.reshape(B, C, H, W)


def _ref_position_embedding_sine(mask, num_pos_feats=64, temperature=10000.0,
                                 normalize=False, scale=2 * math.pi):
    """Pure-JAX reference mirroring the PyTorch forward."""
    not_mask = (~mask).astype(jnp.float32)
    y_embed = jnp.cumsum(not_mask, axis=1)
    x_embed = jnp.cumsum(not_mask, axis=2)
    if normalize:
        eps = 1e-6
        y_embed = y_embed / (y_embed[:, -1:, :] + eps) * scale
        x_embed = x_embed / (x_embed[:, :, -1:] + eps) * scale
    dim_t = jnp.arange(num_pos_feats, dtype=jnp.float32)
    dim_t = temperature ** (2 * jnp.floor(dim_t / 2) / num_pos_feats)
    pos_x = x_embed[:, :, :, None] / dim_t
    pos_y = y_embed[:, :, :, None] / dim_t
    pos_x = jnp.stack((jnp.sin(pos_x[:, :, :, 0::2]),
                       jnp.cos(pos_x[:, :, :, 1::2])), axis=4)
    pos_x = pos_x.reshape(*pos_x.shape[:3], -1)
    pos_y = jnp.stack((jnp.sin(pos_y[:, :, :, 0::2]),
                       jnp.cos(pos_y[:, :, :, 1::2])), axis=4)
    pos_y = pos_y.reshape(*pos_y.shape[:3], -1)
    return jnp.concatenate((pos_y, pos_x), axis=3).transpose(0, 3, 1, 2)


if __name__ == "__main__":
    key = jax.random.PRNGKey(0)
    B, Cin, H, W = 2, 4, 16, 16
    num_pos_feats = 64

    kx, kh, kw = jax.random.split(key, 3)
    # x corresponds to NestedTensor.tensors; only its spatial shape / mask matter.
    x = jax.random.normal(kx, (B, Cin, H, W), dtype=jnp.float32)
    valid_h = jax.random.randint(kh, (B,), 8, H + 1)
    valid_w = jax.random.randint(kw, (B,), 8, W + 1)
    hh = jnp.arange(H)[None, :, None]
    ww = jnp.arange(W)[None, None, :]
    mask = (hh >= valid_h[:, None, None]) | (ww >= valid_w[:, None, None])  # True = padded

    for normalize, scale in [(False, None), (True, 2 * math.pi)]:
        pos = position_embedding_sine(mask, num_pos_feats=num_pos_feats,
                                      temperature=10000,
                                      normalize=normalize, scale=scale)
        pos = jax.block_until_ready(pos)
        ref = _ref_position_embedding_sine(
            mask, num_pos_feats=num_pos_feats, temperature=10000.0,
            normalize=normalize,
            scale=(2 * math.pi if scale is None else scale))
        assert pos.shape == (B, 2 * num_pos_feats, H, W), pos.shape
        max_err = float(jnp.max(jnp.abs(pos - ref)))
        assert max_err < 1e-4, f"mismatch (normalize={normalize}): {max_err}"

    print("KERNEL_OK")
</pallas_src>

<mosaic_0001>
module attributes {stable_mosaic.version = 11 : i64} {
  func.func @_pos_embed_kernel(%arg0: i32, %arg1: i32, %arg2: memref<1x1x128xf32, #tpu.memory_space<vmem>>, %arg3: memref<1x1x128xf32, #tpu.memory_space<vmem>>, %arg4: memref<64x2xf32, #tpu.memory_space<vmem>>, %arg5: memref<1x128x128xf32, #tpu.memory_space<vmem>>) attributes {dimension_semantics = [#tpu.dimension_semantics<parallel>, #tpu.dimension_semantics<parallel>], iteration_bounds = array<i64: 2, 2>, scalar_prefetch = 0 : i64, scratch_operands = 0 : i64, tpu.core_type = #tpu.core_type<tc>, window_params = [{transform_indices = @transform_0, window_bounds = array<i64: 1, 1, 128>}, {transform_indices = @transform_1, window_bounds = array<i64: 1, 1, 128>}, {pipeline_mode = #tpu.pipeline_mode<synchronous>, transform_indices = @transform_2, window_bounds = array<i64: 64, 2>}, {transform_indices = @transform_3, window_bounds = array<i64: 1, 128, 128>}]} {
    %c0 = arith.constant 0 : index
    %c0_0 = arith.constant 0 : index
    %0 = vector.load %arg4[%c0, %c0_0] : memref<64x2xf32, #tpu.memory_space<vmem>>, vector<64x1xf32>
    %c0_1 = arith.constant 0 : index
    %c1 = arith.constant 1 : index
    %1 = vector.load %arg4[%c0_1, %c1] : memref<64x2xf32, #tpu.memory_space<vmem>>, vector<64x1xf32>
    %c0_2 = arith.constant 0 : index
    %c0_3 = arith.constant 0 : index
    %c0_4 = arith.constant 0 : index
    %2 = vector.load %arg2[%c0_2, %c0_3, %c0_4] : memref<1x1x128xf32, #tpu.memory_space<vmem>>, vector<1x1x128xf32>
    %3 = vector.shape_cast %2 : vector<1x1x128xf32> to vector<1x128xf32>
    %c0_5 = arith.constant 0 : index
    %c0_6 = arith.constant 0 : index
    %c0_7 = arith.constant 0 : index
    %4 = vector.load %arg3[%c0_5, %c0_6, %c0_7] : memref<1x1x128xf32, #tpu.memory_space<vmem>>, vector<1x1x128xf32>
    %5 = vector.shape_cast %4 : vector<1x1x128xf32> to vector<1x128xf32>
    %6 = vector.broadcast %3 : vector<1x128xf32> to vector<64x128xf32>
    %7 = vector.broadcast %0 : vector<64x1xf32> to vector<64x128xf32>
    %8 = arith.mulf %6, %7 : vector<64x128xf32>
    %9 = vector.broadcast %1 : vector<64x1xf32> to vector<64x128xf32>
    %10 = arith.addf %8, %9 : vector<64x128xf32>
    %11 = math.sin %10 : vector<64x128xf32>
    %c0_8 = arith.constant 0 : index
    %c0_9 = arith.constant 0 : index
    %c0_10 = arith.constant 0 : index
    %12 = vector.load %arg5[%c0_8, %c0_9, %c0_10] : memref<1x128x128xf32, #tpu.memory_space<vmem>>, vector<1x64x128xf32>
    %13 = vector.shape_cast %12 : vector<1x64x128xf32> to vector<64x128xf32>
    %14 = vector.shape_cast %11 : vector<64x128xf32> to vector<1x64x128xf32>
    tpu.vector_store %arg5[%c0_8, %c0_9, %c0_10], %14 {strides = array<i32>} : memref<1x128x128xf32, #tpu.memory_space<vmem>>, vector<1x64x128xf32>,
    %15 = vector.broadcast %5 : vector<1x128xf32> to vector<64x128xf32>
    %16 = vector.broadcast %0 : vector<64x1xf32> to vector<64x128xf32>
    %17 = arith.mulf %15, %16 : vector<64x128xf32>
    %18 = vector.broadcast %1 : vector<64x1xf32> to vector<64x128xf32>
    %19 = arith.addf %17, %18 : vector<64x128xf32>
    %20 = math.sin %19 : vector<64x128xf32>
    %c0_11 = arith.constant 0 : index
    %c64 = arith.constant 64 : index
    %c0_12 = arith.constant 0 : index
    %21 = vector.load %arg5[%c0_11, %c64, %c0_12] : memref<1x128x128xf32, #tpu.memory_space<vmem>>, vector<1x64x128xf32>
    %22 = vector.shape_cast %21 : vector<1x64x128xf32> to vector<64x128xf32>
    %23 = vector.shape_cast %20 : vector<64x128xf32> to vector<1x64x128xf32>
    tpu.vector_store %arg5[%c0_11, %c64, %c0_12], %23 {strides = array<i32>} : memref<1x128x128xf32, #tpu.memory_space<vmem>>, vector<1x64x128xf32>,
    return
  }
  func.func @transform_0(%arg0: i32, %arg1: i32) -> (i32, i32, i32) {
    %c0_i32 = arith.constant 0 : i32
    %c0_i32_0 = arith.constant 0 : i32
    return %arg0, %c0_i32, %arg1 : i32, i32, i32
  }
  func.func @transform_1(%arg0: i32, %arg1: i32) -> (i32, i32, i32) {
    %c0_i32 = arith.constant 0 : i32
    %c0_i32_0 = arith.constant 0 : i32
    return %arg0, %c0_i32, %arg1 : i32, i32, i32
  }
  func.func @transform_2(%arg0: i32, %arg1: i32) -> (i32, i32) {
    %c0_i32 = arith.constant 0 : i32
    %c0_i32_0 = arith.constant 0 : i32
    %c0_i32_1 = arith.constant 0 : i32
    return %c0_i32, %c0_i32_0 : i32, i32
  }
  func.func @transform_3(%arg0: i32, %arg1: i32) -> (i32, i32, i32) {
    %c0_i32 = arith.constant 0 : i32
    %c0_i32_0 = arith.constant 0 : i32
    return %arg0, %c0_i32, %arg1 : i32, i32, i32
  }
}

</mosaic_0001>

<llo_original>
// kernel: tpu_custom_call.1
$region0: #{tpu_custom_call.1}
  #allocation0 [shape = 'u32[]', space=smem, size = 0x4, offset = 0x4, fixed_abs, tag = 'smem constant byte address 0x4 - core index']
  #allocation1 [shape = 'u32[72,128]{1,0:T(1,128)}', space=vmem, size = 0x9000, scoped, tag = 'internal scratch']
  %s0 = inlined_call_operand.vmem [shape: f32[2,1,256], index: 0, kind: input, shape index: {}]
  %s1 = inlined_call_operand.vmem [shape: f32[2,1,256], index: 1, kind: input, shape index: {}]
  %s2 = inlined_call_operand.vmem [shape: f32[64,2], index: 2, kind: input, shape index: {}]
  %s3 = inlined_call_operand.hbm [shape: f32[2,128,256], index: 3, kind: output, shape index: {}]
  %s4 = sld [smem:[#allocation0]]
  $region45: #{tpu_custom_call.1} parent=0
    _
  %s6 = ssub.s32 1, %s4
  %s7 = scalar_select 0, %s6, %s4
  $region1: #{tpu_custom_call.1} parent=0
    #allocation2 [shape = 'u8[131072]{0}', space=vmem, size = 0x20000, scoped, tag = 'output window, operand 0']
    #allocation3 [shape = 's32[2]{0}', space=sflag, size = 0x8, scoped, tag = 'scoped memory for tpu_custom_call.1']
    %8 = vsyncpa [#allocation3], 0
    %s9 = scalar_lea.sflag [#allocation3], 1
    %10 = vsyncpa %s9, 0
    loop: start=0, step=1, limit=6
    $region2: #{tpu_custom_call.1} parent=1 // loop_pre_header
      _
    $region3: #{tpu_custom_call.1} parent=1 // loop_header
      %s12 = sphi 0, %s16
      %p13 = scmp.ge.s32.totalorder %s12, 6
      %s19 = sphi 0, %s31
      %s20 = sphi 0, %s27
      %s21 = sphi 0, %s19
      %s22 = sphi 0, %s20
      %s23 = sphi 0, %s21
      %s24 = sphi 0, %s22
      %s36 = sphi 0, %s38
      %s39 = sphi 0, %s36
      %s40 = sphi 0, %s39
      %s56 = sphi 0, %s40
      %s64 = sphi 0, %s66
      %s67 = sphi 0, %s64
      %s68 = sphi 0, %s67
      %s84 = sphi 0, %s68
      %s88 = sphi 0, %s88
      %s90 = sphi 0, %s88
      %s91 = sphi 0, %s90
      %s105 = sphi 0, %s91
      %s113 = sphi 0, %s115
      %s116 = sphi 0, %s113
      %s117 = sphi 0, %s116
      %s133 = sphi 0, %s117
    $region4: #{tpu_custom_call.1} parent=1 // loop_header_branch
      %15 = sbr.rel (%p13) target = $region8
    $region5: #{tpu_custom_call.1} parent=1 // loop_body
      %s17 = ssub.s32 %s12, 1
      %s18 = ssub.s32 %s12, 2
      %s25 = sadd.s32 1, %s20
      %p26 = scmp.ge.s32.totalorder %s25, 2
      %s27 = scalar_select %p26, 0, %s25
      %s28 = sadd.s32 1, %s19
      %s29 = scalar_select %p26, %s28, %s19
      %p30 = scmp.ge.s32.totalorder %s29, 2
      %s31 = scalar_select %p30, 0, %s29
      %s32 = ssub.s32 %s19, %s31
      %s33 = ssub.s32 %s20, %s27
      %s34 = sor.u32 %s32, %s33
      %p35 = scmp.eq.s32.totalorder %s34, 0
      %s37 = sadd.s32 %s36, 1
      %s38 = scalar_select %p35, %s36, %s37
      %p41 = pneg %p35
      %p42 = scmp.eq.s32.totalorder %s12, 3
      %p43 = por %p41, %p42
      %p44 = scmp.ne.s32.totalorder %s36, %s39
      %p45 = scmp.eq.s32.totalorder %s12, 0
      %p46 = por %p44, %p45
      %p47 = scmp.ne.s32.totalorder %s36, %s39
      %p48 = scmp.eq.s32.totalorder %s17, 3
      %p49 = por %p47, %p48
      %p50 = scmp.ne.s32.totalorder %s39, %s40
      %p51 = scmp.eq.s32.totalorder %s17, 0
      %p52 = por %p50, %p51
      %p53 = scmp.ne.s32.totalorder %s39, %s40
      %p54 = scmp.eq.s32.totalorder %s18, 3
      %p55 = por %p53, %p54
      %p57 = scmp.ne.s32.totalorder %s40, %s56
      %p58 = scmp.eq.s32.totalorder %s18, 0
      %p59 = por %p57, %p58
      %s60 = ssub.s32 %s19, %s31
      %s61 = ssub.s32 %s20, %s27
      %s62 = sor.u32 %s60, %s61
      %p63 = scmp.eq.s32.totalorder %s62, 0
      %s65 = sadd.s32 %s64, 1
      %s66 = scalar_select %p63, %s64, %s65
      %p69 = pneg %p63
      %p70 = scmp.eq.s32.totalorder %s12, 3
      %p71 = por %p69, %p70
      %p72 = scmp.ne.s32.totalorder %s64, %s67
      %p73 = scmp.eq.s32.totalorder %s12, 0
      %p74 = por %p72, %p73
      %p75 = scmp.ne.s32.totalorder %s64, %s67
      %p76 = scmp.eq.s32.totalorder %s17, 3
      %p77 = por %p75, %p76
      %p78 = scmp.ne.s32.totalorder %s67, %s68
      %p79 = scmp.eq.s32.totalorder %s17, 0
      %p80 = por %p78, %p79
      %p81 = scmp.ne.s32.totalorder %s67, %s68
      %p82 = scmp.eq.s32.totalorder %s18, 3
      %p83 = por %p81, %p82
      %p85 = scmp.ne.s32.totalorder %s68, %s84
      %p86 = scmp.eq.s32.totalorder %s18, 0
      %p87 = por %p85, %p86
      %s89 = sadd.s32 %s88, 1
      %p92 = scmp.eq.s32.totalorder %s12, 3
      %p93 = scmp.ne.s32.totalorder %s88, %s90
      %p94 = scmp.eq.s32.totalorder %s12, 0
      %p95 = por %p93, %p94
      %p96 = scmp.ne.s32.totalorder %s88, %s90
      %p97 = scmp.eq.s32.totalorder %s17, 3
      %p98 = por %p96, %p97
      %p99 = scmp.ne.s32.totalorder %s90, %s91
      %p100 = scmp.eq.s32.totalorder %s17, 0
      %p101 = por %p99, %p100
      %p102 = scmp.ne.s32.totalorder %s90, %s91
      %p103 = scmp.eq.s32.totalorder %s18, 3
      %p104 = por %p102, %p103
      %p106 = scmp.ne.s32.totalorder %s91, %s105
      %p107 = scmp.eq.s32.totalorder %s18, 0
      %p108 = por %p106, %p107
      %s109 = ssub.s32 %s19, %s31
      %s110 = ssub.s32 %s20, %s27
      %s111 = sor.u32 %s109, %s110
      %p112 = scmp.eq.s32.totalorder %s111, 0
      %s114 = sadd.s32 %s113, 1
      %s115 = scalar_select %p112, %s113, %s114
      %p118 = pneg %p112
      %p119 = scmp.eq.s32.totalorder %s12, 3
      %p120 = por %p118, %p119
      %p121 = scmp.ne.s32.totalorder %s113, %s116
      %p122 = scmp.eq.s32.totalorder %s12, 0
      %p123 = por %p121, %p122
      %p124 = scmp.ne.s32.totalorder %s113, %s116
      %p125 = scmp.eq.s32.totalorder %s17, 3
      %p126 = por %p124, %p125
      %p127 = scmp.ne.s32.totalorder %s116, %s117
      %p128 = scmp.eq.s32.totalorder %s17, 0
      %p129 = por %p127, %p128
      %p130 = scmp.ne.s32.totalorder %s116, %s117
      %p131 = scmp.eq.s32.totalorder %s18, 3
      %p132 = por %p130, %p131
      %p134 = scmp.ne.s32.totalorder %s117, %s133
      %p135 = scmp.eq.s32.totalorder %s18, 0
      %p136 = por %p134, %p135
      %p137 = scmp.le.s32.totalorder 1, %s12
      %p138 = scmp.lt.s32.totalorder %s12, 5
      %p139 = pnand %p137, %p138
      %p140 = pneg %p139
      // Predicated region
      $region9: #{tpu_custom_call.1} parent=5 // pred_check
        _
      $region10: #{tpu_custom_call.1} parent=5 // pred_check_branch
        %142 = sbr.rel (%p139) target = $region12
      $region11: #{tpu_custom_call.1} parent=5 // pred_region
        %s143 = ssub.s32 %s12, 1
        // Predicated region
        $region13: #{tpu_custom_call.1} parent=11 // pred_check
          %p144 = pneg %p101
        $region14: #{tpu_custom_call.1} parent=11 // pred_check_branch
          %146 = sbr.rel (%p144) target = $region16
        $region15: #{tpu_custom_call.1} parent=11 // pred_region
          _
        $region16: #{tpu_custom_call.1} parent=11 // pred_fallthru
          _
      $region12: #{tpu_custom_call.1} parent=5 // pred_fallthru
        _
      %p147 = scmp.lt.s32.totalorder %s12, 4
      // Predicated region
      $region17: #{tpu_custom_call.1} parent=5 // pred_check
        %p148 = pneg %p147
      $region18: #{tpu_custom_call.1} parent=5 // pred_check_branch
        %150 = sbr.rel (%p148) target = $region20
      $region19: #{tpu_custom_call.1} parent=5 // pred_region
        // Predicated region
        $region21: #{tpu_custom_call.1} parent=19 // pred_check
          %p151 = pneg %p46
        $region22: #{tpu_custom_call.1} parent=19 // pred_check_branch
          %153 = sbr.rel (%p151) target = $region24
        $region23: #{tpu_custom_call.1} parent=19 // pred_region
          %p154 = scmp.lt.s32.totalorder %s19, 1
          %s155 = scalar_select %p154, %s19, 1
          %p156 = scmp.lt.s32.totalorder %s20, 1
          %s157 = scalar_select %p156, %s20, 1
          %s158 = smul.addr %s155, 2
          %s159 = sadd.s32 %s157, %s158
          %s160 = scalar_lea.vmem %s0, %s159
        $region24: #{tpu_custom_call.1} parent=19 // pred_fallthru
          _
        // Predicated region
        $region25: #{tpu_custom_call.1} parent=19 // pred_check
          %p161 = pneg %p74
        $region26: #{tpu_custom_call.1} parent=19 // pred_check_branch
          %163 = sbr.rel (%p161) target = $region28
        $region27: #{tpu_custom_call.1} parent=19 // pred_region
          %p164 = scmp.lt.s32.totalorder %s19, 1
          %s165 = scalar_select %p164, %s19, 1
          %p166 = scmp.lt.s32.totalorder %s20, 1
          %s167 = scalar_select %p166, %s20, 1
          %s168 = smul.addr %s165, 2
          %s169 = sadd.s32 %s167, %s168
          %s170 = scalar_lea.vmem %s1, %s169
        $region28: #{tpu_custom_call.1} parent=19 // pred_fallthru
          _
      $region20: #{tpu_custom_call.1} parent=5 // pred_fallthru
        _
      %p171 = scmp.le.s32.totalorder 1, %s12
      %p172 = scmp.lt.s32.totalorder %s12, 5
      %p173 = pnand %p171, %p172
      %p174 = pneg %p173
      // Predicated region
      $region29: #{tpu_custom_call.1} parent=5 // pred_check
        _
      $region30: #{tpu_custom_call.1} parent=5 // pred_check_branch
        %176 = sbr.rel (%p173) target = $region32
      $region31: #{tpu_custom_call.1} parent=5 // pred_region
        %s177 = ssub.s32 %s12, 1
        %p178 = scmp.lt.s32.totalorder %s21, 1
        %s179 = scalar_select %p178, %s21, 1
        %p180 = scmp.lt.s32.totalorder %s22, 1
        %s181 = scalar_select %p180, %s22, 1
        %s182 = smul.addr %s179, 2
        %s183 = sadd.s32 %s181, %s182
        %s184 = scalar_lea.vmem %s0, %s183
        %p185 = pneg %p52
        %p186 = pneg %p49
        %p187 = scmp.lt.s32.totalorder %s21, 1
        %s188 = scalar_select %p187, %s21, 1
        %p189 = scmp.lt.s32.totalorder %s22, 1
        %s190 = scalar_select %p189, %s22, 1
        %s191 = smul.addr %s188, 2
        %s192 = sadd.s32 %s190, %s191
        %s193 = scalar_lea.vmem %s1, %s192
        %p194 = pneg %p80
        %p195 = pneg %p77
        %p196 = pneg %p101
        %p197 = pneg %p98
        %p198 = pneg %p129
        %p199 = pneg %p126
        %s200 = sand.u32 %s116, 1
        %s201 = scalar_lea.sflag [#allocation3], %s200
        %s202 = sand.u32 %s116, 1
        %s203 = smul.addr %s202, 128
        %s204 = scalar_lea.vmem [#allocation2], %s203
        %p205 = scmp.lt.s32.totalorder %s21, 1
        %s206 = scalar_select %p205, %s21, 1
        %p207 = scmp.lt.s32.totalorder %s22, 1
        %s208 = scalar_select %p207, %s22, 1
        %s209 = smul.addr %s206, 2
        %s210 = sadd.s32 %s208, %s209
        %s211 = scalar_lea.vmem %s0, %s210
        %p212 = scmp.lt.s32.totalorder %s21, 1
        %s213 = scalar_select %p212, %s21, 1
        %p214 = scmp.lt.s32.totalorder %s22, 1
        %s215 = scalar_select %p214, %s22, 1
        %s216 = smul.addr %s213, 2
        %s217 = sadd.s32 %s215, %s216
        %s218 = scalar_lea.vmem %s1, %s217
        %v219 = vld [vmem:[%s2] sm:$0xff]
        %v220 = vld [vmem:[%s2 + $0x8] sm:$0xff]
        %v221 = vld [vmem:[%s2 + $0x10] sm:$0xff]
        %v222 = vld [vmem:[%s2 + $0x18] sm:$0xff]
        %v223 = vld [vmem:[%s2 + $0x20] sm:$0xff]
        %v224 = vld [vmem:[%s2 + $0x28] sm:$0xff]
        %v225 = vld [vmem:[%s2 + $0x30] sm:$0xff]
        %v226 = vld [vmem:[%s2 + $0x38] sm:$0xff]
        %v227 = vld [vmem:[%s211] sm:$0x1]
        %v228 = vld [vmem:[%s218] sm:$0x1]
        %v230 = vperm.slane %v227, 0
        %233 = vset.pattern.permute.xlu0 0
        %234 = vperm.xlu0 %233, %v219
        %v235 = vpop.permute.xlu0 %234
        %238 = vset.pattern.permute.xlu0 0
        %239 = vperm.xlu0 %238, %v220
        %v240 = vpop.permute.xlu0 %239
        %243 = vset.pattern.permute.xlu0 0
        %244 = vperm.xlu0 %243, %v221
        %v245 = vpop.permute.xlu0 %244
        %248 = vset.pattern.permute.xlu0 0
        %249 = vperm.xlu0 %248, %v222
        %v250 = vpop.permute.xlu0 %249
        %253 = vset.pattern.permute.xlu0 0
        %254 = vperm.xlu0 %253, %v223
        %v255 = vpop.permute.xlu0 %254
        %258 = vset.pattern.permute.xlu0 0
        %259 = vperm.xlu0 %258, %v224
        %v260 = vpop.permute.xlu0 %259
        %263 = vset.pattern.permute.xlu0 0
        %264 = vperm.xlu0 %263, %v225
        %v265 = vpop.permute.xlu0 %264
        %268 = vset.pattern.permute.xlu0 0
        %269 = vperm.xlu0 %268, %v226
        %v270 = vpop.permute.xlu0 %269
        %v272 = vmul.f32 %v230, %v235
        %v273 = vmul.f32 %v230, %v240
        %v274 = vmul.f32 %v230, %v245
        %v275 = vmul.f32 %v230, %v250
        %v276 = vmul.f32 %v230, %v255
        %v277 = vmul.f32 %v230, %v260
        %v278 = vmul.f32 %v230, %v265
        %v279 = vmul.f32 %v230, %v270
        %280 = vset.pattern.permute.xlu0 1
        %281 = vperm.xlu0 %280, %v219
        %v282 = vpop.permute.xlu0 %281
        %284 = vset.pattern.permute.xlu0 1
        %285 = vperm.xlu0 %284, %v220
        %v286 = vpop.permute.xlu0 %285
        %288 = vset.pattern.permute.xlu0 1
        %289 = vperm.xlu0 %288, %v221
        %v290 = vpop.permute.xlu0 %289
        %292 = vset.pattern.permute.xlu0 1
        %293 = vperm.xlu0 %292, %v222
        %v294 = vpop.permute.xlu0 %293
        %296 = vset.pattern.permute.xlu0 1
        %297 = vperm.xlu0 %296, %v223
        %v298 = vpop.permute.xlu0 %297
        %300 = vset.pattern.permute.xlu0 1
        %301 = vperm.xlu0 %300, %v224
        %v302 = vpop.permute.xlu0 %301
        %304 = vset.pattern.permute.xlu0 1
        %305 = vperm.xlu0 %304, %v225
        %v306 = vpop.permute.xlu0 %305
        %308 = vset.pattern.permute.xlu0 1
        %309 = vperm.xlu0 %308, %v226
        %v310 = vpop.permute.xlu0 %309
        %v312 = vadd.f32 %v272, %v282
        %v313 = vadd.f32 %v273, %v286
        %v314 = vadd.f32 %v274, %v290
        %v315 = vadd.f32 %v275, %v294
        %v316 = vadd.f32 %v276, %v298
        %v317 = vadd.f32 %v277, %v302
        %v318 = vadd.f32 %v278, %v306
        %v319 = vadd.f32 %v279, %v310
        %v320 = vand.u32 2147483647, %v312
        %vm321 = vcmp.le.f32.partialorder %v320, 0.7853982
        %vm322 = vcmp.lt.s32.totalorder %v312, 0
        %v323 = vand.u32 %v312, 2139095040
        %v324 = vshrl.u32 %v323, 23
        %v325 = vsub.s32 %v324, 127
        %v326 = vand.u32 2147483647, %v312
        %v327 = vand.u32 %v326, 8388607
        %v328 = vor.u32 %v327, 8388608
        %v329 = vsub.s32 0, %v328
        %v330 = vadd.s32 %v325, 1
        %vm331 = vcmp.gt.s32.totalorder %v330, 0
        %v332 = vsel %vm331, %v330, 0
        %v333 = vshrl.u32 %v332, 5
        %v334 = vand.u32 %v332, 31
        %v335 = vsub.s32 32, %v334
        %v336 = vshrl.u32 683565275, %v335
        %v337 = vshll.u32 683565275, %v334
        %v338 = vshrl.u32 2475754826, %v335
        %v339 = vor.u32 %v337, %v338
        %v340 = vshll.u32 2475754826, %v334
        %v341 = vshrl.u32 2131351028, %v335
        %v342 = vor.u32 %v340, %v341
        %v343 = vshll.u32 2131351028, %v334
        %v344 = vshrl.u32 2102212464, %v335
        %v345 = vor.u32 %v343, %v344
        %v346 = vshll.u32 2102212464, %v334
        %v347 = vshrl.u32 920167782, %v335
        %v348 = vor.u32 %v346, %v347
        %v349 = vshll.u32 920167782, %v334
        %v350 = vshrl.u32 1326507024, %v335
        %v351 = vor.u32 %v349, %v350
        %vm352 = vcmp.lt.s32.totalorder %v333, 1
        %vm353 = vcmp.lt.s32.totalorder %v333, 2
        %vm354 = vcmp.lt.s32.totalorder %v333, 3
        %vm355 = vcmp.lt.s32.totalorder %v333, 4
        %v356 = vsel %vm352, %v336, %v339
        %v357 = vsel %vm355, %v345, 2102212464
        %v358 = vsel %vm354, %v342, %v357
        %v359 = vsel %vm353, %v356, %v358
        %v360 = vsel %vm352, %v339, %v342
        %v361 = vsel %vm355, %v348, 920167782
        %v362 = vsel %vm354, %v345, %v361
        %v363 = vsel %vm353, %v360, %v362
        %v364 = vsel %vm352, %v342, %v345
        %v365 = vsel %vm355, %v351, 1326507024
        %v366 = vsel %vm354, %v348, %v365
        %v367 = vsel %vm353, %v364, %v366
        %v368 = vshll.u32 %v328, 8
        %v369 = vand.u32 %v368, 65535
        %v370 = vshrl.u32 %v368, 16
        %v371 = vand.u32 %v367, 65535
        %v372 = vshrl.u32 %v367, 16
        %v373 = vmul.u32 %v369, %v371
        %v374 = vmul.u32 %v369, %v372
        %v375 = vmul.u32 %v370, %v371
        %v376 = vmul.u32 %v370, %v372
        %v377 = vshll.u32 %v374, 16
        %v378 = vshrl.u32 %v374, 16
        %v379 = vshll.u32 %v375, 16
        %v380 = vshrl.u32 %v375, 16
        %vm381 = vc.u32 %v373, %v377
        %v382 = vsel %vm381, 1, 0
        %v383 = vadd.s32 %v373, %v377
        %v384 = vadd.s32 %v376, %v382
        %vm385 = vc.u32 %v383, %v379
        %v386 = vsel %vm385, 1, 0
        %v387 = vadd.s32 %v383, %v379
        %v388 = vadd.s32 %v384, %v386
        %v389 = vadd.s32 %v388, %v378
        %v390 = vadd.s32 %v389, %v380
        %v391 = vand.u32 %v368, 65535
        %v392 = vshrl.u32 %v368, 16
        %v393 = vand.u32 %v363, 65535
        %v394 = vshrl.u32 %v363, 16
        %v395 = vmul.u32 %v391, %v393
        %v396 = vmul.u32 %v391, %v394
        %v397 = vmul.u32 %v392, %v393
        %v398 = vmul.u32 %v392, %v394
        %v399 = vshll.u32 %v396, 16
        %v400 = vshrl.u32 %v396, 16
        %v401 = vshll.u32 %v397, 16
        %v402 = vshrl.u32 %v397, 16
        %vm403 = vc.u32 %v395, %v399
        %v404 = vsel %vm403, 1, 0
        %v405 = vadd.s32 %v395, %v399
        %v406 = vadd.s32 %v398, %v404
        %vm407 = vc.u32 %v405, %v401
        %v408 = vsel %vm407, 1, 0
        %v409 = vadd.s32 %v405, %v401
        %v410 = vadd.s32 %v406, %v408
        %v411 = vadd.s32 %v410, %v400
        %v412 = vadd.s32 %v411, %v402
        %v413 = vmul.u32 %v368, %v359
        %v414 = vadd.s32 %v390, %v409
        %vm415 = vc.u32 %v390, %v409
        %v416 = vadd.s32 %v412, 1
        %v417 = vsel %vm415, %v416, %v412
        %v418 = vadd.s32 %v413, %v417
        %v419 = vadd.s32 %v418, 536870912
        %v420 = vshrl.u32 %v419, 30
        %v421 = vshll.u32 %v420, 30
        %v422 = vsub.s32 %v418, %v421
        %vm423 = vcmp.lt.s32.totalorder %v422, 0
        %v424 = vsub.s32 0, %v422
        %v425 = vsel %vm423, %v424, %v422
        %v426 = vclz %v425
        %v427 = vsub.s32 %v426, 2
        %vm428 = vcmp.gt.s32.totalorder 0, %v427
        %v429 = vsel %vm428, 0, %v427
        %v430 = vsub.s32 32, %v429
        %v431 = vshll.u32 %v422, %v429
        %v432 = vshrl.u32 %v414, %v430
        %v433 = vor.u32 %v431, %v432
        %v434 = vsub.s32 4294967266, %v429
        %v435 = vadd.s32 %v434, 127
        %v436 = vshll.u32 %v435, 23
        %v437 = vor.u32 4788187, %v436
        %v438 = vand.u32 2147483647, %v437
        %v440 = vcvt.s32.f32 %v433
        %v441 = vmul.f32 %v440, %v438
        %v442 = vxor.u32 %v441, 2147483648
        %v443 = vsel %vm322, %v442, %v441
        %v444 = vsub.s32 4, %v420
        %v445 = vsel %vm322, %v444, %v420
        %v446 = vsel %vm321, %v312, %v443
        %v447 = vsel %vm321, 0, %v445
        %v448 = vmul.f32 %v446, %v446
        %v449 = vmul.f32 %v448, -0.001358992
        %v450 = vadd.f32 %v449, 0.041655596
        %v451 = vmul.f32 %v448, %v450
        %v452 = vadd.f32 %v451, -0.4999988
        %v453 = vmul.f32 %v448, %v452
        %v454 = vadd.f32 1.0, %v453
        %v455 = vmul.f32 %v446, %v446
        %v456 = vmul.f32 %v455, -0.00019511016
        %v457 = vadd.f32 %v456, 0.008332121
        %v458 = vmul.f32 %v455, %v457
        %v459 = vadd.f32 %v458, -0.16666654
        %v460 = vmul.f32 %v455, %v459
        %v461 = vadd.f32 %v460, 1.0
        %v462 = vmul.f32 %v461, %v446
        %vm463 = vweird.f32 %v312
        %v464 = vadd.s32 %v447, 3
        %v465 = vand.u32 %v464, 3
        %vm466 = vcmp.lt.s32.totalorder %v465, 2
        %vm467 = vcmp.eq.s32.totalorder %v465, 0
        %v468 = vxor.u32 %v462, 2147483648
        %v469 = vsel %vm467, %v454, %v468
        %vm470 = vcmp.eq.s32.totalorder %v465, 2
        %v471 = vxor.u32 %v454, 2147483648
        %v472 = vsel %vm470, %v471, %v462
        %v473 = vsel %vm466, %v469, %v472
        %v474 = vsel %vm463, nan, %v473
        %v475 = vand.u32 2147483647, %v313
        %vm476 = vcmp.le.f32.partialorder %v475, 0.7853982
        %vm477 = vcmp.lt.s32.totalorder %v313, 0
        %v478 = vand.u32 %v313, 2139095040
        %v479 = vshrl.u32 %v478, 23
        %v480 = vsub.s32 %v479, 127
        %v481 = vand.u32 2147483647, %v313
        %v482 = vand.u32 %v481, 8388607
        %v483 = vor.u32 %v482, 8388608
        %v484 = vsub.s32 0, %v483
        %v485 = vadd.s32 %v480, 1
        %vm486 = vcmp.gt.s32.totalorder %v485, 0
        %v487 = vsel %vm486, %v485, 0
        %v488 = vshrl.u32 %v487, 5
        %v489 = vand.u32 %v487, 31
        %v490 = vsub.s32 32, %v489
        %v491 = vshrl.u32 683565275, %v490
        %v492 = vshll.u32 683565275, %v489
        %v493 = vshrl.u32 2475754826, %v490
        %v494 = vor.u32 %v492, %v493
        %v495 = vshll.u32 2475754826, %v489
        %v496 = vshrl.u32 2131351028, %v490
        %v497 = vor.u32 %v495, %v496
        %v498 = vshll.u32 2131351028, %v489
        %v499 = vshrl.u32 2102212464, %v490
        %v500 = vor.u32 %v498, %v499
        %v501 = vshll.u32 2102212464, %v489
        %v502 = vshrl.u32 920167782, %v490
        %v503 = vor.u32 %v501, %v502
        %v504 = vshll.u32 920167782, %v489
        %v505 = vshrl.u32 1326507024, %v490
        %v506 = vor.u32 %v504, %v505
        %vm507 = vcmp.lt.s32.totalorder %v488, 1
        %vm508 = vcmp.lt.s32.totalorder %v488, 2
        %vm509 = vcmp.lt.s32.totalorder %v488, 3
        %vm510 = vcmp.lt.s32.totalorder %v488, 4
        %v511 = vsel %vm507, %v491, %v494
        %v512 = vsel %vm510, %v500, 2102212464
        %v513 = vsel %vm509, %v497, %v512
        %v514 = vsel %vm508, %v511, %v513
        %v515 = vsel %vm507, %v494, %v497
        %v516 = vsel %vm510, %v503, 920167782
        %v517 = vsel %vm509, %v500, %v516
        %v518 = vsel %vm508, %v515, %v517
        %v519 = vsel %vm507, %v497, %v500
        %v520 = vsel %vm510, %v506, 1326507024
        %v521 = vsel %vm509, %v503, %v520
        %v522 = vsel %vm508, %v519, %v521
        %v523 = vshll.u32 %v483, 8
        %v524 = vand.u32 %v523, 65535
        %v525 = vshrl.u32 %v523, 16
        %v526 = vand.u32 %v522, 65535
        %v527 = vshrl.u32 %v522, 16
        %v528 = vmul.u32 %v524, %v526
        %v529 = vmul.u32 %v524, %v527
        %v530 = vmul.u32 %v525, %v526
        %v531 = vmul.u32 %v525, %v527
        %v532 = vshll.u32 %v529, 16
        %v533 = vshrl.u32 %v529, 16
        %v534 = vshll.u32 %v530, 16
        %v535 = vshrl.u32 %v530, 16
        %vm536 = vc.u32 %v528, %v532
        %v537 = vsel %vm536, 1, 0
        %v538 = vadd.s32 %v528, %v532
        %v539 = vadd.s32 %v531, %v537
        %vm540 = vc.u32 %v538, %v534
        %v541 = vsel %vm540, 1, 0
        %v542 = vadd.s32 %v538, %v534
        %v543 = vadd.s32 %v539, %v541
        %v544 = vadd.s32 %v543, %v533
        %v545 = vadd.s32 %v544, %v535
        %v546 = vand.u32 %v523, 65535
        %v547 = vshrl.u32 %v523, 16
        %v548 = vand.u32 %v518, 65535
        %v549 = vshrl.u32 %v518, 16
        %v550 = vmul.u32 %v546, %v548
        %v551 = vmul.u32 %v546, %v549
        %v552 = vmul.u32 %v547, %v548
        %v553 = vmul.u32 %v547, %v549
        %v554 = vshll.u32 %v551, 16
        %v555 = vshrl.u32 %v551, 16
        %v556 = vshll.u32 %v552, 16
        %v557 = vshrl.u32 %v552, 16
        %vm558 = vc.u32 %v550, %v554
        %v559 = vsel %vm558, 1, 0
        %v560 = vadd.s32 %v550, %v554
        %v561 = vadd.s32 %v553, %v559
        %vm562 = vc.u32 %v560, %v556
        %v563 = vsel %vm562, 1, 0
        %v564 = vadd.s32 %v560, %v556
        %v565 = vadd.s32 %v561, %v563
        %v566 = vadd.s32 %v565, %v555
        %v567 = vadd.s32 %v566, %v557
        %v568 = vmul.u32 %v523, %v514
        %v569 = vadd.s32 %v545, %v564
        %vm570 = vc.u32 %v545, %v564
        %v571 = vadd.s32 %v567, 1
        %v572 = vsel %vm570, %v571, %v567
        %v573 = vadd.s32 %v568, %v572
        %v574 = vadd.s32 %v573, 536870912
        %v575 = vshrl.u32 %v574, 30
        %v576 = vshll.u32 %v575, 30
        %v577 = vsub.s32 %v573, %v576
        %vm578 = vcmp.lt.s32.totalorder %v577, 0
        %v579 = vsub.s32 0, %v577
        %v580 = vsel %vm578, %v579, %v577
        %v581 = vclz %v580
        %v582 = vsub.s32 %v581, 2
        %vm583 = vcmp.gt.s32.totalorder 0, %v582
        %v584 = vsel %vm583, 0, %v582
        %v585 = vsub.s32 32, %v584
        %v586 = vshll.u32 %v577, %v584
        %v587 = vshrl.u32 %v569, %v585
        %v588 = vor.u32 %v586, %v587
        %v589 = vsub.s32 4294967266, %v584
        %v590 = vadd.s32 %v589, 127
        %v591 = vshll.u32 %v590, 23
        %v592 = vor.u32 4788187, %v591
        %v593 = vand.u32 2147483647, %v592
        %v595 = vcvt.s32.f32 %v588
        %v596 = vmul.f32 %v595, %v593
        %v597 = vxor.u32 %v596, 2147483648
        %v598 = vsel %vm477, %v597, %v596
        %v599 = vsub.s32 4, %v575
        %v600 = vsel %vm477, %v599, %v575
        %v601 = vsel %vm476, %v313, %v598
        %v602 = vsel %vm476, 0, %v600
        %v603 = vmul.f32 %v601, %v601
        %v604 = vmul.f32 %v603, -0.001358992
        %v605 = vadd.f32 %v604, 0.041655596
        %v606 = vmul.f32 %v603, %v605
        %v607 = vadd.f32 %v606, -0.4999988
        %v608 = vmul.f32 %v603, %v607
        %v609 = vadd.f32 1.0, %v608
        %v610 = vmul.f32 %v601, %v601
        %v611 = vmul.f32 %v610, -0.00019511016
        %v612 = vadd.f32 %v611, 0.008332121
        %v613 = vmul.f32 %v610, %v612
        %v614 = vadd.f32 %v613, -0.16666654
        %v615 = vmul.f32 %v610, %v614
        %v616 = vadd.f32 %v615, 1.0
        %v617 = vmul.f32 %v616, %v601
        %vm618 = vweird.f32 %v313
        %v619 = vadd.s32 %v602, 3
        %v620 = vand.u32 %v619, 3
        %vm621 = vcmp.lt.s32.totalorder %v620, 2
        %vm622 = vcmp.eq.s32.totalorder %v620, 0
        %v623 = vxor.u32 %v617, 2147483648
        %v624 = vsel %vm622, %v609, %v623
        %vm625 = vcmp.eq.s32.totalorder %v620, 2
        %v626 = vxor.u32 %v609, 2147483648
        %v627 = vsel %vm625, %v626, %v617
        %v628 = vsel %vm621, %v624, %v627
        %v629 = vsel %vm618, nan, %v628
        %v630 = vand.u32 2147483647, %v314
        %vm631 = vcmp.le.f32.partialorder %v630, 0.7853982
        %vm632 = vcmp.lt.s32.totalorder %v314, 0
        %v633 = vand.u32 %v314, 2139095040
        %v634 = vshrl.u32 %v633, 23
        %v635 = vsub.s32 %v634, 127
        %v636 = vand.u32 2147483647, %v314
        %v637 = vand.u32 %v636, 8388607
        %v638 = vor.u32 %v637, 8388608
        %v639 = vsub.s32 0, %v638
        %v640 = vadd.s32 %v635, 1
        %vm641 = vcmp.gt.s32.totalorder %v640, 0
        %v642 = vsel %vm641, %v640, 0
        %v643 = vshrl.u32 %v642, 5
        %v644 = vand.u32 %v642, 31
        %v645 = vsub.s32 32, %v644
        %v646 = vshrl.u32 683565275, %v645
        %v647 = vshll.u32 683565275, %v644
        %v648 = vshrl.u32 2475754826, %v645
        %v649 = vor.u32 %v647, %v648
        %v650 = vshll.u32 2475754826, %v644
        %v651 = vshrl.u32 2131351028, %v645
        %v652 = vor.u32 %v650, %v651
        %v653 = vshll.u32 2131351028, %v644
        %v654 = vshrl.u32 2102212464, %v645
        %v655 = vor.u32 %v653, %v654
        %v656 = vshll.u32 2102212464, %v644
        %v657 = vshrl.u32 920167782, %v645
        %v658 = vor.u32 %v656, %v657
        %v659 = vshll.u32 920167782, %v644
        %v660 = vshrl.u32 1326507024, %v645
        %v661 = vor.u32 %v659, %v660
        %vm662 = vcmp.lt.s32.totalorder %v643, 1
        %vm663 = vcmp.lt.s32.totalorder %v643, 2
        %vm664 = vcmp.lt.s32.totalorder %v643, 3
        %vm665 = vcmp.lt.s32.totalorder %v643, 4
        %v666 = vsel %vm662, %v646, %v649
        %v667 = vsel %vm665, %v655, 2102212464
        %v668 = vsel %vm664, %v652, %v667
        %v669 = vsel %vm663, %v666, %v668
        %v670 = vsel %vm662, %v649, %v652
        %v671 = vsel %vm665, %v658, 920167782
        %v672 = vsel %vm664, %v655, %v671
        %v673 = vsel %vm663, %v670, %v672
        %v674 = vsel %vm662, %v652, %v655
        %v675 = vsel %vm665, %v661, 1326507024
        %v676 = vsel %vm664, %v658, %v675
        %v677 = vsel %vm663, %v674, %v676
        %v678 = vshll.u32 %v638, 8
        %v679 = vand.u32 %v678, 65535
        %v680 = vshrl.u32 %v678, 16
        %v681 = vand.u32 %v677, 65535
        %v682 = vshrl.u32 %v677, 16
        %v683 = vmul.u32 %v679, %v681
        %v684 = vmul.u32 %v679, %v682
        %v685 = vmul.u32 %v680, %v681
        %v686 = vmul.u32 %v680, %v682
        %v687 = vshll.u32 %v684, 16
        %v688 = vshrl.u32 %v684, 16
        %v689 = vshll.u32 %v685, 16
        %v690 = vshrl.u32 %v685, 16
        %vm691 = vc.u32 %v683, %v687
        %v692 = vsel %vm691, 1, 0
        %v693 = vadd.s32 %v683, %v687
        %v694 = vadd.s32 %v686, %v692
        %vm695 = vc.u32 %v693, %v689
        %v696 = vsel %vm695, 1, 0
        %v697 = vadd.s32 %v693, %v689
        %v698 = vadd.s32 %v694, %v696
        %v699 = vadd.s32 %v698, %v688
        %v700 = vadd.s32 %v699, %v690
        %v701 = vand.u32 %v678, 65535
        %v702 = vshrl.u32 %v678, 16
        %v703 = vand.u32 %v673, 65535
        %v704 = vshrl.u32 %v673, 16
        %v705 = vmul.u32 %v701, %v703
        %v706 = vmul.u32 %v701, %v704
        %v707 = vmul.u32 %v702, %v703
        %v708 = vmul.u32 %v702, %v704
        %v709 = vshll.u32 %v706, 16
        %v710 = vshrl.u32 %v706, 16
        %v711 = vshll.u32 %v707, 16
        %v712 = vshrl.u32 %v707, 16
        %vm713 = vc.u32 %v705, %v709
        %v714 = vsel %vm713, 1, 0
        %v715 = vadd.s32 %v705, %v709
        %v716 = vadd.s32 %v708, %v714
        %vm717 = vc.u32 %v715, %v711
        %v718 = vsel %vm717, 1, 0
        %v719 = vadd.s32 %v715, %v711
        %v720 = vadd.s32 %v716, %v718
        %v721 = vadd.s32 %v720, %v710
        %v722 = vadd.s32 %v721, %v712
        %v723 = vmul.u32 %v678, %v669
        %v724 = vadd.s32 %v700, %v719
        %vm725 = vc.u32 %v700, %v719
        %v726 = vadd.s32 %v722, 1
        %v727 = vsel %vm725, %v726, %v722
        %v728 = vadd.s32 %v723, %v727
        %v729 = vadd.s32 %v728, 536870912
        %v730 = vshrl.u32 %v729, 30
        %v731 = vshll.u32 %v730, 30
        %v732 = vsub.s32 %v728, %v731
        %vm733 = vcmp.lt.s32.totalorder %v732, 0
        %v734 = vsub.s32 0, %v732
        %v735 = vsel %vm733, %v734, %v732
        %v736 = vclz %v735
        %v737 = vsub.s32 %v736, 2
        %vm738 = vcmp.gt.s32.totalorder 0, %v737
        %v739 = vsel %vm738, 0, %v737
        %v740 = vsub.s32 32, %v739
        %v741 = vshll.u32 %v732, %v739
        %v742 = vshrl.u32 %v724, %v740
        %v743 = vor.u32 %v741, %v742
        %v744 = vsub.s32 4294967266, %v739
        %v745 = vadd.s32 %v744, 127
        %v746 = vshll.u32 %v745, 23
        %v747 = vor.u32 4788187, %v746
        %v748 = vand.u32 2147483647, %v747
        %v750 = vcvt.s32.f32 %v743
        %v751 = vmul.f32 %v750, %v748
        %v752 = vxor.u32 %v751, 2147483648
        %v753 = vsel %vm632, %v752, %v751
        %v754 = vsub.s32 4, %v730
        %v755 = vsel %vm632, %v754, %v730
        %v756 = vsel %vm631, %v314, %v753
        %v757 = vsel %vm631, 0, %v755
        %v758 = vmul.f32 %v756, %v756
        %v759 = vmul.f32 %v758, -0.001358992
        %v760 = vadd.f32 %v759, 0.041655596
        %v761 = vmul.f32 %v758, %v760
        %v762 = vadd.f32 %v761, -0.4999988
        %v763 = vmul.f32 %v758, %v762
        %v764 = vadd.f32 1.0, %v763
        %v765 = vmul.f32 %v756, %v756
        %v766 = vmul.f32 %v765, -0.00019511016
        %v767 = vadd.f32 %v766, 0.008332121
        %v768 = vmul.f32 %v765, %v767
        %v769 = vadd.f32 %v768, -0.16666654
        %v770 = vmul.f32 %v765, %v769
        %v771 = vadd.f32 %v770, 1.0
        %v772 = vmul.f32 %v771, %v756
        %vm773 = vweird.f32 %v314
        %v774 = vadd.s32 %v757, 3
        %v775 = vand.u32 %v774, 3
        %vm776 = vcmp.lt.s32.totalorder %v775, 2
        %vm777 = vcmp.eq.s32.totalorder %v775, 0
        %v778 = vxor.u32 %v772, 2147483648
        %v779 = vsel %vm777, %v764, %v778
        %vm780 = vcmp.eq.s32.totalorder %v775, 2
        %v781 = vxor.u32 %v764, 2147483648
        %v782 = vsel %vm780, %v781, %v772
        %v783 = vsel %vm776, %v779, %v782
        %v784 = vsel %vm773, nan, %v783
        %v785 = vand.u32 2147483647, %v315
        %vm786 = vcmp.le.f32.partialorder %v785, 0.7853982
        %vm787 = vcmp.lt.s32.totalorder %v315, 0
        %v788 = vand.u32 %v315, 2139095040
        %v789 = vshrl.u32 %v788, 23
        %v790 = vsub.s32 %v789, 127
        %v791 = vand.u32 2147483647, %v315
        %v792 = vand.u32 %v791, 8388607
        %v793 = vor.u32 %v792, 8388608
        %v794 = vsub.s32 0, %v793
        %v795 = vadd.s32 %v790, 1
        %vm796 = vcmp.gt.s32.totalorder %v795, 0
        %v797 = vsel %vm796, %v795, 0
        %v798 = vshrl.u32 %v797, 5
        %v799 = vand.u32 %v797, 31
        %v800 = vsub.s32 32, %v799
        %v801 = vshrl.u32 683565275, %v800
        %v802 = vshll.u32 683565275, %v799
        %v803 = vshrl.u32 2475754826, %v800
        %v804 = vor.u32 %v802, %v803
        %v805 = vshll.u32 2475754826, %v799
        %v806 = vshrl.u32 2131351028, %v800
        %v807 = vor.u32 %v805, %v806
        %v808 = vshll.u32 2131351028, %v799
        %v809 = vshrl.u32 2102212464, %v800
        %v810 = vor.u32 %v808, %v809
        %v811 = vshll.u32 2102212464, %v799
        %v812 = vshrl.u32 920167782, %v800
        %v813 = vor.u32 %v811, %v812
        %v814 = vshll.u32 920167782, %v799
        %v815 = vshrl.u32 1326507024, %v800
        %v816 = vor.u32 %v814, %v815
        %vm817 = vcmp.lt.s32.totalorder %v798, 1
        %vm818 = vcmp.lt.s32.totalorder %v798, 2
        %vm819 = vcmp.lt.s32.totalorder %v798, 3
        %vm820 = vcmp.lt.s32.totalorder %v798, 4
        %v821 = vsel %vm817, %v801, %v804
        %v822 = vsel %vm820, %v810, 2102212464
        %v823 = vsel %vm819, %v807, %v822
        %v824 = vsel %vm818, %v821, %v823
        %v825 = vsel %vm817, %v804, %v807
        %v826 = vsel %vm820, %v813, 920167782
        %v827 = vsel %vm819, %v810, %v826
        %v828 = vsel %vm818, %v825, %v827
        %v829 = vsel %vm817, %v807, %v810
        %v830 = vsel %vm820, %v816, 1326507024
        %v831 = vsel %vm819, %v813, %v830
        %v832 = vsel %vm818, %v829, %v831
        %v833 = vshll.u32 %v793, 8
        %v834 = vand.u32 %v833, 65535
        %v835 = vshrl.u32 %v833, 16
        %v836 = vand.u32 %v832, 65535
        %v837 = vshrl.u32 %v832, 16
        %v838 = vmul.u32 %v834, %v836
        %v839 = vmul.u32 %v834, %v837
        %v840 = vmul.u32 %v835, %v836
        %v841 = vmul.u32 %v835, %v837
        %v842 = vshll.u32 %v839, 16
        %v843 = vshrl.u32 %v839, 16
        %v844 = vshll.u32 %v840, 16
        %v845 = vshrl.u32 %v840, 16
        %vm846 = vc.u32 %v838, %v842
        %v847 = vsel %vm846, 1, 0
        %v848 = vadd.s32 %v838, %v842
        %v849 = vadd.s32 %v841, %v847
        %vm850 = vc.u32 %v848, %v844
        %v851 = vsel %vm850, 1, 0
        %v852 = vadd.s32 %v848, %v844
        %v853 = vadd.s32 %v849, %v851
        %v854 = vadd.s32 %v853, %v843
        %v855 = vadd.s32 %v854, %v845
        %v856 = vand.u32 %v833, 65535
        %v857 = vshrl.u32 %v833, 16
        %v858 = vand.u32 %v828, 65535
        %v859 = vshrl.u32 %v828, 16
        %v860 = vmul.u32 %v856, %v858
        %v861 = vmul.u32 %v856, %v859
        %v862 = vmul.u32 %v857, %v858
        %v863 = vmul.u32 %v857, %v859
        %v864 = vshll.u32 %v861, 16
        %v865 = vshrl.u32 %v861, 16
        %v866 = vshll.u32 %v862, 16
        %v867 = vshrl.u32 %v862, 16
        %vm868 = vc.u32 %v860, %v864
        %v869 = vsel %vm868, 1, 0
        %v870 = vadd.s32 %v860, %v864
        %v871 = vadd.s32 %v863, %v869
        %vm872 = vc.u32 %v870, %v866
        %v873 = vsel %vm872, 1, 0
        %v874 = vadd.s32 %v870, %v866
        %v875 = vadd.s32 %v871, %v873
        %v876 = vadd.s32 %v875, %v865
        %v877 = vadd.s32 %v876, %v867
        %v878 = vmul.u32 %v833, %v824
        %v879 = vadd.s32 %v855, %v874
        %vm880 = vc.u32 %v855, %v874
        %v881 = vadd.s32 %v877, 1
        %v882 = vsel %vm880, %v881, %v877
        %v883 = vadd.s32 %v878, %v882
        %v884 = vadd.s32 %v883, 536870912
        %v885 = vshrl.u32 %v884, 30
        %v886 = vshll.u32 %v885, 30
        %v887 = vsub.s32 %v883, %v886
        %vm888 = vcmp.lt.s32.totalorder %v887, 0
        %v889 = vsub.s32 0, %v887
        %v890 = vsel %vm888, %v889, %v887
        %v891 = vclz %v890
        %v892 = vsub.s32 %v891, 2
        %vm893 = vcmp.gt.s32.totalorder 0, %v892
        %v894 = vsel %vm893, 0, %v892
        %v895 = vsub.s32 32, %v894
        %v896 = vshll.u32 %v887, %v894
        %v897 = vshrl.u32 %v879, %v895
        %v898 = vor.u32 %v896, %v897
        %v899 = vsub.s32 4294967266, %v894
        %v900 = vadd.s32 %v899, 127
        %v901 = vshll.u32 %v900, 23
        %v902 = vor.u32 4788187, %v901
        %v903 = vand.u32 2147483647, %v902
        %v905 = vcvt.s32.f32 %v898
        %v906 = vmul.f32 %v905, %v903
        %v907 = vxor.u32 %v906, 2147483648
        %v908 = vsel %vm787, %v907, %v906
        %v909 = vsub.s32 4, %v885
        %v910 = vsel %vm787, %v909, %v885
        %v911 = vsel %vm786, %v315, %v908
        %v912 = vsel %vm786, 0, %v910
        %v913 = vmul.f32 %v911, %v911
        %v914 = vmul.f32 %v913, -0.001358992
        %v915 = vadd.f32 %v914, 0.041655596
        %v916 = vmul.f32 %v913, %v915
        %v917 = vadd.f32 %v916, -0.4999988
        %v918 = vmul.f32 %v913, %v917
        %v919 = vadd.f32 1.0, %v918
        %v920 = vmul.f32 %v911, %v911
        %v921 = vmul.f32 %v920, -0.00019511016
        %v922 = vadd.f32 %v921, 0.008332121
        %v923 = vmul.f32 %v920, %v922
        %v924 = vadd.f32 %v923, -0.16666654
        %v925 = vmul.f32 %v920, %v924
        %v926 = vadd.f32 %v925, 1.0
        %v927 = vmul.f32 %v926, %v911
        %vm928 = vweird.f32 %v315
        %v929 = vadd.s32 %v912, 3
        %v930 = vand.u32 %v929, 3
        %vm931 = vcmp.lt.s32.totalorder %v930, 2
        %vm932 = vcmp.eq.s32.totalorder %v930, 0
        %v933 = vxor.u32 %v927, 2147483648
        %v934 = vsel %vm932, %v919, %v933
        %vm935 = vcmp.eq.s32.totalorder %v930, 2
        %v936 = vxor.u32 %v919, 2147483648
        %v937 = vsel %vm935, %v936, %v927
        %v938 = vsel %vm931, %v934, %v937
        %v939 = vsel %vm928, nan, %v938
        %v940 = vand.u32 2147483647, %v316
        %vm941 = vcmp.le.f32.partialorder %v940, 0.7853982
        %vm942 = vcmp.lt.s32.totalorder %v316, 0
        %v943 = vand.u32 %v316, 2139095040
        %v944 = vshrl.u32 %v943, 23
        %v945 = vsub.s32 %v944, 127
        %v946 = vand.u32 2147483647, %v316
        %v947 = vand.u32 %v946, 8388607
        %v948 = vor.u32 %v947, 8388608
        %v949 = vsub.s32 0, %v948
        %v950 = vadd.s32 %v945, 1
        %vm951 = vcmp.gt.s32.totalorder %v950, 0
        %v952 = vsel %vm951, %v950, 0
        %v953 = vshrl.u32 %v952, 5
        %v954 = vand.u32 %v952, 31
        %v955 = vsub.s32 32, %v954
        %v956 = vshrl.u32 683565275, %v955
        %v957 = vshll.u32 683565275, %v954
        %v958 = vshrl.u32 2475754826, %v955
        %v959 = vor.u32 %v957, %v958
        %v960 = vshll.u32 2475754826, %v954
        %v961 = vshrl.u32 2131351028, %v955
        %v962 = vor.u32 %v960, %v961
        %v963 = vshll.u32 2131351028, %v954
        %v964 = vshrl.u32 2102212464, %v955
        %v965 = vor.u32 %v963, %v964
        %v966 = vshll.u32 2102212464, %v954
        %v967 = vshrl.u32 920167782, %v955
        %v968 = vor.u32 %v966, %v967
        %v969 = vshll.u32 920167782, %v954
        %v970 = vshrl.u32 1326507024, %v955
        %v971 = vor.u32 %v969, %v970
        %vm972 = vcmp.lt.s32.totalorder %v953, 1
        %vm973 = vcmp.lt.s32.totalorder %v953, 2
        %vm974 = vcmp.lt.s32.totalorder %v953, 3
        %vm975 = vcmp.lt.s32.totalorder %v953, 4
        %v976 = vsel %vm972, %v956, %v959
        %v977 = vsel %vm975, %v965, 2102212464
        %v978 = vsel %vm974, %v962, %v977
        %v979 = vsel %vm973, %v976, %v978
        %v980 = vsel %vm972, %v959, %v962
        %v981 = vsel %vm975, %v968, 920167782
        %v982 = vsel %vm974, %v965, %v981
        %v983 = vsel %vm973, %v980, %v982
        %v984 = vsel %vm972, %v962, %v965
        %v985 = vsel %vm975, %v971, 1326507024
        %v986 = vsel %vm974, %v968, %v985
        %v987 = vsel %vm973, %v984, %v986
        %v988 = vshll.u32 %v948, 8
        %v989 = vand.u32 %v988, 65535
        %v990 = vshrl.u32 %v988, 16
        %v991 = vand.u32 %v987, 65535
        %v992 = vshrl.u32 %v987, 16
        %v993 = vmul.u32 %v989, %v991
        %v994 = vmul.u32 %v989, %v992
        %v995 = vmul.u32 %v990, %v991
        %v996 = vmul.u32 %v990, %v992
        %v997 = vshll.u32 %v994, 16
        %v998 = vshrl.u32 %v994, 16
        %v999 = vshll.u32 %v995, 16
        %v1000 = vshrl.u32 %v995, 16
        %vm1001 = vc.u32 %v993, %v997
        %v1002 = vsel %vm1001, 1, 0
        %v1003 = vadd.s32 %v993, %v997
        %v1004 = vadd.s32 %v996, %v1002
        %vm1005 = vc.u32 %v1003, %v999
        %v1006 = vsel %vm1005, 1, 0
        %v1007 = vadd.s32 %v1003, %v999
        %v1008 = vadd.s32 %v1004, %v1006
        %v1009 = vadd.s32 %v1008, %v998
        %v1010 = vadd.s32 %v1009, %v1000
        %v1011 = vand.u32 %v988, 65535
        %v1012 = vshrl.u32 %v988, 16
        %v1013 = vand.u32 %v983, 65535
        %v1014 = vshrl.u32 %v983, 16
        %v1015 = vmul.u32 %v1011, %v1013
        %v1016 = vmul.u32 %v1011, %v1014
        %v1017 = vmul.u32 %v1012, %v1013
        %v1018 = vmul.u32 %v1012, %v1014
        %v1019 = vshll.u32 %v1016, 16
        %v1020 = vshrl.u32 %v1016, 16
        %v1021 = vshll.u32 %v1017, 16
        %v1022 = vshrl.u32 %v1017, 16
        %vm1023 = vc.u32 %v1015, %v1019
        %v1024 = vsel %vm1023, 1, 0
        %v1025 = vadd.s32 %v1015, %v1019
        %v1026 = vadd.s32 %v1018, %v1024
        %vm1027 = vc.u32 %v1025, %v1021
        %v1028 = vsel %vm1027, 1, 0
        %v1029 = vadd.s32 %v1025, %v1021
        %v1030 = vadd.s32 %v1026, %v1028
        %v1031 = vadd.s32 %v1030, %v1020
        %v1032 = vadd.s32 %v1031, %v1022
        %v1033 = vmul.u32 %v988, %v979
        %v1034 = vadd.s32 %v1010, %v1029
        %vm1035 = vc.u32 %v1010, %v1029
        %v1036 = vadd.s32 %v1032, 1
        %v1037 = vsel %vm1035, %v1036, %v1032
        %v1038 = vadd.s32 %v1033, %v1037
        %v1039 = vadd.s32 %v1038, 536870912
        %v1040 = vshrl.u32 %v1039, 30
        %v1041 = vshll.u32 %v1040, 30
        %v1042 = vsub.s32 %v1038, %v1041
        %vm1043 = vcmp.lt.s32.totalorder %v1042, 0
        %v1044 = vsub.s32 0, %v1042
        %v1045 = vsel %vm1043, %v1044, %v1042
        %v1046 = vclz %v1045
        %v1047 = vsub.s32 %v1046, 2
        %vm1048 = vcmp.gt.s32.totalorder 0, %v1047
        %v1049 = vsel %vm1048, 0, %v1047
        %v1050 = vsub.s32 32, %v1049
        %v1051 = vshll.u32 %v1042, %v1049
        %v1052 = vshrl.u32 %v1034, %v1050
        %v1053 = vor.u32 %v1051, %v1052
        %v1054 = vsub.s32 4294967266, %v1049
        %v1055 = vadd.s32 %v1054, 127
        %v1056 = vshll.u32 %v1055, 23
        %v1057 = vor.u32 4788187, %v1056
        %v1058 = vand.u32 2147483647, %v1057
        %v1060 = vcvt.s32.f32 %v1053
        %v1061 = vmul.f32 %v1060, %v1058
        %v1062 = vxor.u32 %v1061, 2147483648
        %v1063 = vsel %vm942, %v1062, %v1061
        %v1064 = vsub.s32 4, %v1040
        %v1065 = vsel %vm942, %v1064, %v1040
        %v1066 = vsel %vm941, %v316, %v1063
        %v1067 = vsel %vm941, 0, %v1065
        %v1068 = vmul.f32 %v1066, %v1066
        %v1069 = vmul.f32 %v1068, -0.001358992
        %v1070 = vadd.f32 %v1069, 0.041655596
        %v1071 = vmul.f32 %v1068, %v1070
        %v1072 = vadd.f32 %v1071, -0.4999988
        %v1073 = vmul.f32 %v1068, %v1072
        %v1074 = vadd.f32 1.0, %v1073
        %v1075 = vmul.f32 %v1066, %v1066
        %v1076 = vmul.f32 %v1075, -0.00019511016
        %v1077 = vadd.f32 %v1076, 0.008332121
        %v1078 = vmul.f32 %v1075, %v1077
        %v1079 = vadd.f32 %v1078, -0.16666654
        %v1080 = vmul.f32 %v1075, %v1079
        %v1081 = vadd.f32 %v1080, 1.0
        %v1082 = vmul.f32 %v1081, %v1066
        %vm1083 = vweird.f32 %v316
        %v1084 = vadd.s32 %v1067, 3
        %v1085 = vand.u32 %v1084, 3
        %vm1086 = vcmp.lt.s32.totalorder %v1085, 2
        %vm1087 = vcmp.eq.s32.totalorder %v1085, 0
        %v1088 = vxor.u32 %v1082, 2147483648
        %v1089 = vsel %vm1087, %v1074, %v1088
        %vm1090 = vcmp.eq.s32.totalorder %v1085, 2
        %v1091 = vxor.u32 %v1074, 2147483648
        %v1092 = vsel %vm1090, %v1091, %v1082
        %v1093 = vsel %vm1086, %v1089, %v1092
        %v1094 = vsel %vm1083, nan, %v1093
        %v1095 = vand.u32 2147483647, %v317
        %vm1096 = vcmp.le.f32.partialorder %v1095, 0.7853982
        %vm1097 = vcmp.lt.s32.totalorder %v317, 0
        %v1098 = vand.u32 %v317, 2139095040
        %v1099 = vshrl.u32 %v1098, 23
        %v1100 = vsub.s32 %v1099, 127
        %v1101 = vand.u32 2147483647, %v317
        %v1102 = vand.u32 %v1101, 8388607
        %v1103 = vor.u32 %v1102, 8388608
        %v1104 = vsub.s32 0, %v1103
        %v1105 = vadd.s32 %v1100, 1
        %vm1106 = vcmp.gt.s32.totalorder %v1105, 0
        %v1107 = vsel %vm1106, %v1105, 0
        %v1108 = vshrl.u32 %v1107, 5
        %v1109 = vand.u32 %v1107, 31
        %v1110 = vsub.s32 32, %v1109
        %v1111 = vshrl.u32 683565275, %v1110
        %v1112 = vshll.u32 683565275, %v1109
        %v1113 = vshrl.u32 2475754826, %v1110
        %v1114 = vor.u32 %v1112, %v1113
        %v1115 = vshll.u32 2475754826, %v1109
        %v1116 = vshrl.u32 2131351028, %v1110
        %v1117 = vor.u32 %v1115, %v1116
        %v1118 = vshll.u32 2131351028, %v1109
        %v1119 = vshrl.u32 2102212464, %v1110
        %v1120 = vor.u32 %v1118, %v1119
        %v1121 = vshll.u32 2102212464, %v1109
        %v1122 = vshrl.u32 920167782, %v1110
        %v1123 = vor.u32 %v1121, %v1122
        %v1124 = vshll.u32 920167782, %v1109
        %v1125 = vshrl.u32 1326507024, %v1110
        %v1126 = vor.u32 %v1124, %v1125
        %vm1127 = vcmp.lt.s32.totalorder %v1108, 1
        %vm1128 = vcmp.lt.s32.totalorder %v1108, 2
        %vm1129 = vcmp.lt.s32.totalorder %v1108, 3
        %vm1130 = vcmp.lt.s32.totalorder %v1108, 4
        %v1131 = vsel %vm1127, %v1111, %v1114
        %v1132 = vsel %vm1130, %v1120, 2102212464
        %v1133 = vsel %vm1129, %v1117, %v1132
        %v1134 = vsel %vm1128, %v1131, %v1133
        %v1135 = vsel %vm1127, %v1114, %v1117
        %v1136 = vsel %vm1130, %v1123, 920167782
        %v1137 = vsel %vm1129, %v1120, %v1136
        %v1138 = vsel %vm1128, %v1135, %v1137
        %v1139 = vsel %vm1127, %v1117, %v1120
        %v1140 = vsel %vm1130, %v1126, 1326507024
        %v1141 = vsel %vm1129, %v1123, %v1140
        %v1142 = vsel %vm1128, %v1139, %v1141
        %v1143 = vshll.u32 %v1103, 8
        %v1144 = vand.u32 %v1143, 65535
        %v1145 = vshrl.u32 %v1143, 16
        %v1146 = vand.u32 %v1142, 65535
        %v1147 = vshrl.u32 %v1142, 16
        %v1148 = vmul.u32 %v1144, %v1146
        %v1149 = vmul.u32 %v1144, %v1147
        %v1150 = vmul.u32 %v1145, %v1146
        %v1151 = vmul.u32 %v1145, %v1147
        %v1152 = vshll.u32 %v1149, 16
        %v1153 = vshrl.u32 %v1149, 16
        %v1154 = vshll.u32 %v1150, 16
        %v1155 = vshrl.u32 %v1150, 16
        %vm1156 = vc.u32 %v1148, %v1152
        %v1157 = vsel %vm1156, 1, 0
        %v1158 = vadd.s32 %v1148, %v1152
        %v1159 = vadd.s32 %v1151, %v1157
        %vm1160 = vc.u32 %v1158, %v1154
        %v1161 = vsel %vm1160, 1, 0
        %v1162 = vadd.s32 %v1158, %v1154
        %v1163 = vadd.s32 %v1159, %v1161
        %v1164 = vadd.s32 %v1163, %v1153
        %v1165 = vadd.s32 %v1164, %v1155
        %v1166 = vand.u32 %v1143, 65535
        %v1167 = vshrl.u32 %v1143, 16
        %v1168 = vand.u32 %v1138, 65535
        %v1169 = vshrl.u32 %v1138, 16
        %v1170 = vmul.u32 %v1166, %v1168
        %v1171 = vmul.u32 %v1166, %v1169
        %v1172 = vmul.u32 %v1167, %v1168
        %v1173 = vmul.u32 %v1167, %v1169
        %v1174 = vshll.u32 %v1171, 16
        %v1175 = vshrl.u32 %v1171, 16
        %v1176 = vshll.u32 %v1172, 16
        %v1177 = vshrl.u32 %v1172, 16
        %vm1178 = vc.u32 %v1170, %v1174
        %v1179 = vsel %vm1178, 1, 0
        %v1180 = vadd.s32 %v1170, %v1174
        %v1181 = vadd.s32 %v1173, %v1179
        %vm1182 = vc.u32 %v1180, %v1176
        %v1183 = vsel %vm1182, 1, 0
        %v1184 = vadd.s32 %v1180, %v1176
        %v1185 = vadd.s32 %v1181, %v1183
        %v1186 = vadd.s32 %v1185, %v1175
        %v1187 = vadd.s32 %v1186, %v1177
        %v1188 = vmul.u32 %v1143, %v1134
        %v1189 = vadd.s32 %v1165, %v1184
        %vm1190 = vc.u32 %v1165, %v1184
        %v1191 = vadd.s32 %v1187, 1
        %v1192 = vsel %vm1190, %v1191, %v1187
        %v1193 = vadd.s32 %v1188, %v1192
        %v1194 = vadd.s32 %v1193, 536870912
        %v1195 = vshrl.u32 %v1194, 30
        %v1196 = vshll.u32 %v1195, 30
        %v1197 = vsub.s32 %v1193, %v1196
        %vm1198 = vcmp.lt.s32.totalorder %v1197, 0
        %v1199 = vsub.s32 0, %v1197
        %v1200 = vsel %vm1198, %v1199, %v1197
        %v1201 = vclz %v1200
        %v1202 = vsub.s32 %v1201, 2
        %vm1203 = vcmp.gt.s32.totalorder 0, %v1202
        %v1204 = vsel %vm1203, 0, %v1202
        %v1205 = vsub.s32 32, %v1204
        %v1206 = vshll.u32 %v1197, %v1204
        %v1207 = vshrl.u32 %v1189, %v1205
        %v1208 = vor.u32 %v1206, %v1207
        %v1209 = vsub.s32 4294967266, %v1204
        %v1210 = vadd.s32 %v1209, 127
        %v1211 = vshll.u32 %v1210, 23
        %v1212 = vor.u32 4788187, %v1211
        %v1213 = vand.u32 2147483647, %v1212
        %v1215 = vcvt.s32.f32 %v1208
        %v1216 = vmul.f32 %v1215, %v1213
        %v1217 = vxor.u32 %v1216, 2147483648
        %v1218 = vsel %vm1097, %v1217, %v1216
        %v1219 = vsub.s32 4, %v1195
        %v1220 = vsel %vm1097, %v1219, %v1195
        %v1221 = vsel %vm1096, %v317, %v1218
        %v1222 = vsel %vm1096, 0, %v1220
        %v1223 = vmul.f32 %v1221, %v1221
        %v1224 = vmul.f32 %v1223, -0.001358992
        %v1225 = vadd.f32 %v1224, 0.041655596
        %v1226 = vmul.f32 %v1223, %v1225
        %v1227 = vadd.f32 %v1226, -0.4999988
        %v1228 = vmul.f32 %v1223, %v1227
        %v1229 = vadd.f32 1.0, %v1228
        %v1230 = vmul.f32 %v1221, %v1221
        %v1231 = vmul.f32 %v1230, -0.00019511016
        %v1232 = vadd.f32 %v1231, 0.008332121
        %v1233 = vmul.f32 %v1230, %v1232
        %v1234 = vadd.f32 %v1233, -0.16666654
        %v1235 = vmul.f32 %v1230, %v1234
        %v1236 = vadd.f32 %v1235, 1.0
        %v1237 = vmul.f32 %v1236, %v1221
        %vm1238 = vweird.f32 %v317
        %v1239 = vadd.s32 %v1222, 3
        %v1240 = vand.u32 %v1239, 3
        %vm1241 = vcmp.lt.s32.totalorder %v1240, 2
        %vm1242 = vcmp.eq.s32.totalorder %v1240, 0
        %v1243 = vxor.u32 %v1237, 2147483648
        %v1244 = vsel %vm1242, %v1229, %v1243
        %vm1245 = vcmp.eq.s32.totalorder %v1240, 2
        %v1246 = vxor.u32 %v1229, 2147483648
        %v1247 = vsel %vm1245, %v1246, %v1237
        %v1248 = vsel %vm1241, %v1244, %v1247
        %v1249 = vsel %vm1238, nan, %v1248
        %v1250 = vand.u32 2147483647, %v318
        %vm1251 = vcmp.le.f32.partialorder %v1250, 0.7853982
        %vm1252 = vcmp.lt.s32.totalorder %v318, 0
        %v1253 = vand.u32 %v318, 2139095040
        %v1254 = vshrl.u32 %v1253, 23
        %v1255 = vsub.s32 %v1254, 127
        %v1256 = vand.u32 2147483647, %v318
        %v1257 = vand.u32 %v1256, 8388607
        %v1258 = vor.u32 %v1257, 8388608
        %v1259 = vsub.s32 0, %v1258
        %v1260 = vadd.s32 %v1255, 1
        %vm1261 = vcmp.gt.s32.totalorder %v1260, 0
        %v1262 = vsel %vm1261, %v1260, 0
        %v1263 = vshrl.u32 %v1262, 5
        %v1264 = vand.u32 %v1262, 31
        %v1265 = vsub.s32 32, %v1264
        %v1266 = vshrl.u32 683565275, %v1265
        %v1267 = vshll.u32 683565275, %v1264
        %v1268 = vshrl.u32 2475754826, %v1265
        %v1269 = vor.u32 %v1267, %v1268
        %v1270 = vshll.u32 2475754826, %v1264
        %v1271 = vshrl.u32 2131351028, %v1265
        %v1272 = vor.u32 %v1270, %v1271
        %v1273 = vshll.u32 2131351028, %v1264
        %v1274 = vshrl.u32 2102212464, %v1265
        %v1275 = vor.u32 %v1273, %v1274
        %v1276 = vshll.u32 2102212464, %v1264
        %v1277 = vshrl.u32 920167782, %v1265
        %v1278 = vor.u32 %v1276, %v1277
        %v1279 = vshll.u32 920167782, %v1264
        %v1280 = vshrl.u32 1326507024, %v1265
        %v1281 = vor.u32 %v1279, %v1280
        %vm1282 = vcmp.lt.s32.totalorder %v1263, 1
        %vm1283 = vcmp.lt.s32.totalorder %v1263, 2
        %vm1284 = vcmp.lt.s32.totalorder %v1263, 3
        %vm1285 = vcmp.lt.s32.totalorder %v1263, 4
        %v1286 = vsel %vm1282, %v1266, %v1269
        %v1287 = vsel %vm1285, %v1275, 2102212464
        %v1288 = vsel %vm1284, %v1272, %v1287
        %v1289 = vsel %vm1283, %v1286, %v1288
        %v1290 = vsel %vm1282, %v1269, %v1272
        %v1291 = vsel %vm1285, %v1278, 920167782
        %v1292 = vsel %vm1284, %v1275, %v1291
        %v1293 = vsel %vm1283, %v1290, %v1292
        %v1294 = vsel %vm1282, %v1272, %v1275
        %v1295 = vsel %vm1285, %v1281, 1326507024
        %v1296 = vsel %vm1284, %v1278, %v1295
        %v1297 = vsel %vm1283, %v1294, %v1296
        %v1298 = vshll.u32 %v1258, 8
        %v1299 = vand.u32 %v1298, 65535
        %v1300 = vshrl.u32 %v1298, 16
        %v1301 = vand.u32 %v1297, 65535
        %v1302 = vshrl.u32 %v1297, 16
        %v1303 = vmul.u32 %v1299, %v1301
        %v1304 = vmul.u32 %v1299, %v1302
        %v1305 = vmul.u32 %v1300, %v1301
        %v1306 = vmul.u32 %v1300, %v1302
        %v1307 = vshll.u32 %v1304, 16
        %v1308 = vshrl.u32 %v1304, 16
        %v1309 = vshll.u32 %v1305, 16
        %v1310 = vshrl.u32 %v1305, 16
        %vm1311 = vc.u32 %v1303, %v1307
        %v1312 = vsel %vm1311, 1, 0
        %v1313 = vadd.s32 %v1303, %v1307
        %v1314 = vadd.s32 %v1306, %v1312
        %vm1315 = vc.u32 %v1313, %v1309
        %v1316 = vsel %vm1315, 1, 0
        %v1317 = vadd.s32 %v1313, %v1309
        %v1318 = vadd.s32 %v1314, %v1316
        %v1319 = vadd.s32 %v1318, %v1308
        %v1320 = vadd.s32 %v1319, %v1310
        %v1321 = vand.u32 %v1298, 65535
        %v1322 = vshrl.u32 %v1298, 16
        %v1323 = vand.u32 %v1293, 65535
        %v1324 = vshrl.u32 %v1293, 16
        %v1325 = vmul.u32 %v1321, %v1323
        %v1326 = vmul.u32 %v1321, %v1324
        %v1327 = vmul.u32 %v1322, %v1323
        %v1328 = vmul.u32 %v1322, %v1324
        %v1329 = vshll.u32 %v1326, 16
        %v1330 = vshrl.u32 %v1326, 16
        %v1331 = vshll.u32 %v1327, 16
        %v1332 = vshrl.u32 %v1327, 16
        %vm1333 = vc.u32 %v1325, %v1329
        %v1334 = vsel %vm1333, 1, 0
        %v1335 = vadd.s32 %v1325, %v1329
        %v1336 = vadd.s32 %v1328, %v1334
        %vm1337 = vc.u32 %v1335, %v1331
        %v1338 = vsel %vm1337, 1, 0
        %v1339 = vadd.s32 %v1335, %v1331
        %v1340 = vadd.s32 %v1336, %v1338
        %v1341 = vadd.s32 %v1340, %v1330
        %v1342 = vadd.s32 %v1341, %v1332
        %v1343 = vmul.u32 %v1298, %v1289
        %v1344 = vadd.s32 %v1320, %v1339
        %vm1345 = vc.u32 %v1320, %v1339
        %v1346 = vadd.s32 %v1342, 1
        %v1347 = vsel %vm1345, %v1346, %v1342
        %v1348 = vadd.s32 %v1343, %v1347
        %v1349 = vadd.s32 %v1348, 536870912
        %v1350 = vshrl.u32 %v1349, 30
        %v1351 = vshll.u32 %v1350, 30
        %v1352 = vsub.s32 %v1348, %v1351
        %vm1353 = vcmp.lt.s32.totalorder %v1352, 0
        %v1354 = vsub.s32 0, %v1352
        %v1355 = vsel %vm1353, %v1354, %v1352
        %v1356 = vclz %v1355
        %v1357 = vsub.s32 %v1356, 2
        %vm1358 = vcmp.gt.s32.totalorder 0, %v1357
        %v1359 = vsel %vm1358, 0, %v1357
        %v1360 = vsub.s32 32, %v1359
        %v1361 = vshll.u32 %v1352, %v1359
        %v1362 = vshrl.u32 %v1344, %v1360
        %v1363 = vor.u32 %v1361, %v1362
        %v1364 = vsub.s32 4294967266, %v1359
        %v1365 = vadd.s32 %v1364, 127
        %v1366 = vshll.u32 %v1365, 23
        %v1367 = vor.u32 4788187, %v1366
        %v1368 = vand.u32 2147483647, %v1367
        %v1370 = vcvt.s32.f32 %v1363
        %v1371 = vmul.f32 %v1370, %v1368
        %v1372 = vxor.u32 %v1371, 2147483648
        %v1373 = vsel %vm1252, %v1372, %v1371
        %v1374 = vsub.s32 4, %v1350
        %v1375 = vsel %vm1252, %v1374, %v1350
        %v1376 = vsel %vm1251, %v318, %v1373
        %v1377 = vsel %vm1251, 0, %v1375
        %v1378 = vmul.f32 %v1376, %v1376
        %v1379 = vmul.f32 %v1378, -0.001358992
        %v1380 = vadd.f32 %v1379, 0.041655596
        %v1381 = vmul.f32 %v1378, %v1380
        %v1382 = vadd.f32 %v1381, -0.4999988
        %v1383 = vmul.f32 %v1378, %v1382
        %v1384 = vadd.f32 1.0, %v1383
        %v1385 = vmul.f32 %v1376, %v1376
        %v1386 = vmul.f32 %v1385, -0.00019511016
        %v1387 = vadd.f32 %v1386, 0.008332121
        %v1388 = vmul.f32 %v1385, %v1387
        %v1389 = vadd.f32 %v1388, -0.16666654
        %v1390 = vmul.f32 %v1385, %v1389
        %v1391 = vadd.f32 %v1390, 1.0
        %v1392 = vmul.f32 %v1391, %v1376
        %vm1393 = vweird.f32 %v318
        %v1394 = vadd.s32 %v1377, 3
        %v1395 = vand.u32 %v1394, 3
        %vm1396 = vcmp.lt.s32.totalorder %v1395, 2
        %vm1397 = vcmp.eq.s32.totalorder %v1395, 0
        %v1398 = vxor.u32 %v1392, 2147483648
        %v1399 = vsel %vm1397, %v1384, %v1398
        %vm1400 = vcmp.eq.s32.totalorder %v1395, 2
        %v1401 = vxor.u32 %v1384, 2147483648
        %v1402 = vsel %vm1400, %v1401, %v1392
        %v1403 = vsel %vm1396, %v1399, %v1402
        %v1404 = vsel %vm1393, nan, %v1403
        %v1405 = vand.u32 2147483647, %v319
        %vm1406 = vcmp.le.f32.partialorder %v1405, 0.7853982
        %vm1407 = vcmp.lt.s32.totalorder %v319, 0
        %v1408 = vand.u32 %v319, 2139095040
        %v1409 = vshrl.u32 %v1408, 23
        %v1410 = vsub.s32 %v1409, 127
        %v1411 = vand.u32 2147483647, %v319
        %v1412 = vand.u32 %v1411, 8388607
        %v1413 = vor.u32 %v1412, 8388608
        %v1414 = vsub.s32 0, %v1413
        %v1415 = vadd.s32 %v1410, 1
        %vm1416 = vcmp.gt.s32.totalorder %v1415, 0
        %v1417 = vsel %vm1416, %v1415, 0
        %v1418 = vshrl.u32 %v1417, 5
        %v1419 = vand.u32 %v1417, 31
        %v1420 = vsub.s32 32, %v1419
        %v1421 = vshrl.u32 683565275, %v1420
        %v1422 = vshll.u32 683565275, %v1419
        %v1423 = vshrl.u32 2475754826, %v1420
        %v1424 = vor.u32 %v1422, %v1423
        %v1425 = vshll.u32 2475754826, %v1419
        %v1426 = vshrl.u32 2131351028, %v1420
        %v1427 = vor.u32 %v1425, %v1426
        %v1428 = vshll.u32 2131351028, %v1419
        %v1429 = vshrl.u32 2102212464, %v1420
        %v1430 = vor.u32 %v1428, %v1429
        %v1431 = vshll.u32 2102212464, %v1419
        %v1432 = vshrl.u32 920167782, %v1420
        %v1433 = vor.u32 %v1431, %v1432
        %v1434 = vshll.u32 920167782, %v1419
        %v1435 = vshrl.u32 1326507024, %v1420
        %v1436 = vor.u32 %v1434, %v1435
        %vm1437 = vcmp.lt.s32.totalorder %v1418, 1
        %vm1438 = vcmp.lt.s32.totalorder %v1418, 2
        %vm1439 = vcmp.lt.s32.totalorder %v1418, 3
        %vm1440 = vcmp.lt.s32.totalorder %v1418, 4
        %v1441 = vsel %vm1437, %v1421, %v1424
        %v1442 = vsel %vm1440, %v1430, 2102212464
        %v1443 = vsel %vm1439, %v1427, %v1442
        %v1444 = vsel %vm1438, %v1441, %v1443
        %v1445 = vsel %vm1437, %v1424, %v1427
        %v1446 = vsel %vm1440, %v1433, 920167782
        %v1447 = vsel %vm1439, %v1430, %v1446
        %v1448 = vsel %vm1438, %v1445, %v1447
        %v1449 = vsel %vm1437, %v1427, %v1430
        %v1450 = vsel %vm1440, %v1436, 1326507024
        %v1451 = vsel %vm1439, %v1433, %v1450
        %v1452 = vsel %vm1438, %v1449, %v1451
        %v1453 = vshll.u32 %v1413, 8
        %v1454 = vand.u32 %v1453, 65535
        %v1455 = vshrl.u32 %v1453, 16
        %v1456 = vand.u32 %v1452, 65535
        %v1457 = vshrl.u32 %v1452, 16
        %v1458 = vmul.u32 %v1454, %v1456
        %v1459 = vmul.u32 %v1454, %v1457
        %v1460 = vmul.u32 %v1455, %v1456
        %v1461 = vmul.u32 %v1455, %v1457
        %v1462 = vshll.u32 %v1459, 16
        %v1463 = vshrl.u32 %v1459, 16
        %v1464 = vshll.u32 %v1460, 16
        %v1465 = vshrl.u32 %v1460, 16
        %vm1466 = vc.u32 %v1458, %v1462
        %v1467 = vsel %vm1466, 1, 0
        %v1468 = vadd.s32 %v1458, %v1462
        %v1469 = vadd.s32 %v1461, %v1467
        %vm1470 = vc.u32 %v1468, %v1464
        %v1471 = vsel %vm1470, 1, 0
        %v1472 = vadd.s32 %v1468, %v1464
        %v1473 = vadd.s32 %v1469, %v1471
        %v1474 = vadd.s32 %v1473, %v1463
        %v1475 = vadd.s32 %v1474, %v1465
        %v1476 = vand.u32 %v1453, 65535
        %v1477 = vshrl.u32 %v1453, 16
        %v1478 = vand.u32 %v1448, 65535
        %v1479 = vshrl.u32 %v1448, 16
        %v1480 = vmul.u32 %v1476, %v1478
        %v1481 = vmul.u32 %v1476, %v1479
        %v1482 = vmul.u32 %v1477, %v1478
        %v1483 = vmul.u32 %v1477, %v1479
        %v1484 = vshll.u32 %v1481, 16
        %v1485 = vshrl.u32 %v1481, 16
        %v1486 = vshll.u32 %v1482, 16
        %v1487 = vshrl.u32 %v1482, 16
        %vm1488 = vc.u32 %v1480, %v1484
        %v1489 = vsel %vm1488, 1, 0
        %v1490 = vadd.s32 %v1480, %v1484
        %v1491 = vadd.s32 %v1483, %v1489
        %vm1492 = vc.u32 %v1490, %v1486
        %v1493 = vsel %vm1492, 1, 0
        %v1494 = vadd.s32 %v1490, %v1486
        %v1495 = vadd.s32 %v1491, %v1493
        %v1496 = vadd.s32 %v1495, %v1485
        %v1497 = vadd.s32 %v1496, %v1487
        %v1498 = vmul.u32 %v1453, %v1444
        %v1499 = vadd.s32 %v1475, %v1494
        %vm1500 = vc.u32 %v1475, %v1494
        %v1501 = vadd.s32 %v1497, 1
        %v1502 = vsel %vm1500, %v1501, %v1497
        %v1503 = vadd.s32 %v1498, %v1502
        %v1504 = vadd.s32 %v1503, 536870912
        %v1505 = vshrl.u32 %v1504, 30
        %v1506 = vshll.u32 %v1505, 30
        %v1507 = vsub.s32 %v1503, %v1506
        %vm1508 = vcmp.lt.s32.totalorder %v1507, 0
        %v1509 = vsub.s32 0, %v1507
        %v1510 = vsel %vm1508, %v1509, %v1507
        %v1511 = vclz %v1510
        %v1512 = vsub.s32 %v1511, 2
        %vm1513 = vcmp.gt.s32.totalorder 0, %v1512
        %v1514 = vsel %vm1513, 0, %v1512
        %v1515 = vsub.s32 32, %v1514
        %v1516 = vshll.u32 %v1507, %v1514
        %v1517 = vshrl.u32 %v1499, %v1515
        %v1518 = vor.u32 %v1516, %v1517
        %v1519 = vsub.s32 4294967266, %v1514
        %v1520 = vadd.s32 %v1519, 127
        %v1521 = vshll.u32 %v1520, 23
        %v1522 = vor.u32 4788187, %v1521
        %v1523 = vand.u32 2147483647, %v1522
        %v1525 = vcvt.s32.f32 %v1518
        %v1526 = vmul.f32 %v1525, %v1523
        %v1527 = vxor.u32 %v1526, 2147483648
        %v1528 = vsel %vm1407, %v1527, %v1526
        %v1529 = vsub.s32 4, %v1505
        %v1530 = vsel %vm1407, %v1529, %v1505
        %v1531 = vsel %vm1406, %v319, %v1528
        %v1532 = vsel %vm1406, 0, %v1530
        %v1533 = vmul.f32 %v1531, %v1531
        %v1534 = vmul.f32 %v1533, -0.001358992
        %v1535 = vadd.f32 %v1534, 0.041655596
        %v1536 = vmul.f32 %v1533, %v1535
        %v1537 = vadd.f32 %v1536, -0.4999988
        %v1538 = vmul.f32 %v1533, %v1537
        %v1539 = vadd.f32 1.0, %v1538
        %v1540 = vmul.f32 %v1531, %v1531
        %v1541 = vmul.f32 %v1540, -0.00019511016
        %v1542 = vadd.f32 %v1541, 0.008332121
        %v1543 = vmul.f32 %v1540, %v1542
        %v1544 = vadd.f32 %v1543, -0.16666654
        %v1545 = vmul.f32 %v1540, %v1544
        %v1546 = vadd.f32 %v1545, 1.0
        %v1547 = vmul.f32 %v1546, %v1531
        %vm1548 = vweird.f32 %v319
        %v1549 = vadd.s32 %v1532, 3
        %v1550 = vand.u32 %v1549, 3
        %vm1551 = vcmp.lt.s32.totalorder %v1550, 2
        %vm1552 = vcmp.eq.s32.totalorder %v1550, 0
        %v1553 = vxor.u32 %v1547, 2147483648
        %v1554 = vsel %vm1552, %v1539, %v1553
        %vm1555 = vcmp.eq.s32.totalorder %v1550, 2
        %v1556 = vxor.u32 %v1539, 2147483648
        %v1557 = vsel %vm1555, %v1556, %v1547
        %v1558 = vsel %vm1551, %v1554, %v1557
        %v1559 = vsel %vm1548, nan, %v1558
        %1560 = vst [vmem:[%s204] sm:$0xff] %v474
        %1561 = vst [vmem:[%s204 + $0x8] sm:$0xff] %v629
        %1562 = vst [vmem:[%s204 + $0x10] sm:$0xff] %v784
        %1563 = vst [vmem:[%s204 + $0x18] sm:$0xff] %v939
        %1564 = vst [vmem:[%s204 + $0x20] sm:$0xff] %v1094
        %1565 = vst [vmem:[%s204 + $0x28] sm:$0xff] %v1249
        %1566 = vst [vmem:[%s204 + $0x30] sm:$0xff] %v1404
        %1567 = vst [vmem:[%s204 + $0x38] sm:$0xff] %v1559
        %v1569 = vperm.slane %v228, 0
        %v1571 = vmul.f32 %v1569, %v235
        %v1572 = vmul.f32 %v1569, %v240
        %v1573 = vmul.f32 %v1569, %v245
        %v1574 = vmul.f32 %v1569, %v250
        %v1575 = vmul.f32 %v1569, %v255
        %v1576 = vmul.f32 %v1569, %v260
        %v1577 = vmul.f32 %v1569, %v265
        %v1578 = vmul.f32 %v1569, %v270
        %v1579 = vadd.f32 %v1571, %v282
        %v1580 = vadd.f32 %v1572, %v286
        %v1581 = vadd.f32 %v1573, %v290
        %v1582 = vadd.f32 %v1574, %v294
        %v1583 = vadd.f32 %v1575, %v298
        %v1584 = vadd.f32 %v1576, %v302
        %v1585 = vadd.f32 %v1577, %v306
        %v1586 = vadd.f32 %v1578, %v310
        %v1587 = vand.u32 2147483647, %v1579
        %vm1588 = vcmp.le.f32.partialorder %v1587, 0.7853982
        %vm1589 = vcmp.lt.s32.totalorder %v1579, 0
        %v1590 = vand.u32 %v1579, 2139095040
        %v1591 = vshrl.u32 %v1590, 23
        %v1592 = vsub.s32 %v1591, 127
        %v1593 = vand.u32 2147483647, %v1579
        %v1594 = vand.u32 %v1593, 8388607
        %v1595 = vor.u32 %v1594, 8388608
        %v1596 = vsub.s32 0, %v1595
        %v1597 = vadd.s32 %v1592, 1
        %vm1598 = vcmp.gt.s32.totalorder %v1597, 0
        %v1599 = vsel %vm1598, %v1597, 0
        %v1600 = vshrl.u32 %v1599, 5
        %v1601 = vand.u32 %v1599, 31
        %v1602 = vsub.s32 32, %v1601
        %v1603 = vshrl.u32 683565275, %v1602
        %v1604 = vshll.u32 683565275, %v1601
        %v1605 = vshrl.u32 2475754826, %v1602
        %v1606 = vor.u32 %v1604, %v1605
        %v1607 = vshll.u32 2475754826, %v1601
        %v1608 = vshrl.u32 2131351028, %v1602
        %v1609 = vor.u32 %v1607, %v1608
        %v1610 = vshll.u32 2131351028, %v1601
        %v1611 = vshrl.u32 2102212464, %v1602
        %v1612 = vor.u32 %v1610, %v1611
        %v1613 = vshll.u32 2102212464, %v1601
        %v1614 = vshrl.u32 920167782, %v1602
        %v1615 = vor.u32 %v1613, %v1614
        %v1616 = vshll.u32 920167782, %v1601
        %v1617 = vshrl.u32 1326507024, %v1602
        %v1618 = vor.u32 %v1616, %v1617
        %vm1619 = vcmp.lt.s32.totalorder %v1600, 1
        %vm1620 = vcmp.lt.s32.totalorder %v1600, 2
        %vm1621 = vcmp.lt.s32.totalorder %v1600, 3
        %vm1622 = vcmp.lt.s32.totalorder %v1600, 4
        %v1623 = vsel %vm1619, %v1603, %v1606
        %v1624 = vsel %vm1622, %v1612, 2102212464
        %v1625 = vsel %vm1621, %v1609, %v1624
        %v1626 = vsel %vm1620, %v1623, %v1625
        %v1627 = vsel %vm1619, %v1606, %v1609
        %v1628 = vsel %vm1622, %v1615, 920167782
        %v1629 = vsel %vm1621, %v1612, %v1628
        %v1630 = vsel %vm1620, %v1627, %v1629
        %v1631 = vsel %vm1619, %v1609, %v1612
        %v1632 = vsel %vm1622, %v1618, 1326507024
        %v1633 = vsel %vm1621, %v1615, %v1632
        %v1634 = vsel %vm1620, %v1631, %v1633
        %v1635 = vshll.u32 %v1595, 8
        %v1636 = vand.u32 %v1635, 65535
        %v1637 = vshrl.u32 %v1635, 16
        %v1638 = vand.u32 %v1634, 65535
        %v1639 = vshrl.u32 %v1634, 16
        %v1640 = vmul.u32 %v1636, %v1638
        %v1641 = vmul.u32 %v1636, %v1639
        %v1642 = vmul.u32 %v1637, %v1638
        %v1643 = vmul.u32 %v1637, %v1639
        %v1644 = vshll.u32 %v1641, 16
        %v1645 = vshrl.u32 %v1641, 16
        %v1646 = vshll.u32 %v1642, 16
        %v1647 = vshrl.u32 %v1642, 16
        %vm1648 = vc.u32 %v1640, %v1644
        %v1649 = vsel %vm1648, 1, 0
        %v1650 = vadd.s32 %v1640, %v1644
        %v1651 = vadd.s32 %v1643, %v1649
        %vm1652 = vc.u32 %v1650, %v1646
        %v1653 = vsel %vm1652, 1, 0
        %v1654 = vadd.s32 %v1650, %v1646
        %v1655 = vadd.s32 %v1651, %v1653
        %v1656 = vadd.s32 %v1655, %v1645
        %v1657 = vadd.s32 %v1656, %v1647
        %v1658 = vand.u32 %v1635, 65535
        %v1659 = vshrl.u32 %v1635, 16
        %v1660 = vand.u32 %v1630, 65535
        %v1661 = vshrl.u32 %v1630, 16
        %v1662 = vmul.u32 %v1658, %v1660
        %v1663 = vmul.u32 %v1658, %v1661
        %v1664 = vmul.u32 %v1659, %v1660
        %v1665 = vmul.u32 %v1659, %v1661
        %v1666 = vshll.u32 %v1663, 16
        %v1667 = vshrl.u32 %v1663, 16
        %v1668 = vshll.u32 %v1664, 16
        %v1669 = vshrl.u32 %v1664, 16
        %vm1670 = vc.u32 %v1662, %v1666
        %v1671 = vsel %vm1670, 1, 0
        %v1672 = vadd.s32 %v1662, %v1666
        %v1673 = vadd.s32 %v1665, %v1671
        %vm1674 = vc.u32 %v1672, %v1668
        %v1675 = vsel %vm1674, 1, 0
        %v1676 = vadd.s32 %v1672, %v1668
        %v1677 = vadd.s32 %v1673, %v1675
        %v1678 = vadd.s32 %v1677, %v1667
        %v1679 = vadd.s32 %v1678, %v1669
        %v1680 = vmul.u32 %v1635, %v1626
        %v1681 = vadd.s32 %v1657, %v1676
        %vm1682 = vc.u32 %v1657, %v1676
        %v1683 = vadd.s32 %v1679, 1
        %v1684 = vsel %vm1682, %v1683, %v1679
        %v1685 = vadd.s32 %v1680, %v1684
        %v1686 = vadd.s32 %v1685, 536870912
        %v1687 = vshrl.u32 %v1686, 30
        %v1688 = vshll.u32 %v1687, 30
        %v1689 = vsub.s32 %v1685, %v1688
        %vm1690 = vcmp.lt.s32.totalorder %v1689, 0
        %v1691 = vsub.s32 0, %v1689
        %v1692 = vsel %vm1690, %v1691, %v1689
        %v1693 = vclz %v1692
        %v1694 = vsub.s32 %v1693, 2
        %vm1695 = vcmp.gt.s32.totalorder 0, %v1694
        %v1696 = vsel %vm1695, 0, %v1694
        %v1697 = vsub.s32 32, %v1696
        %v1698 = vshll.u32 %v1689, %v1696
        %v1699 = vshrl.u32 %v1681, %v1697
        %v1700 = vor.u32 %v1698, %v1699
        %v1701 = vsub.s32 4294967266, %v1696
        %v1702 = vadd.s32 %v1701, 127
        %v1703 = vshll.u32 %v1702, 23
        %v1704 = vor.u32 4788187, %v1703
        %v1705 = vand.u32 2147483647, %v1704
        %v1707 = vcvt.s32.f32 %v1700
        %v1708 = vmul.f32 %v1707, %v1705
        %v1709 = vxor.u32 %v1708, 2147483648
        %v1710 = vsel %vm1589, %v1709, %v1708
        %v1711 = vsub.s32 4, %v1687
        %v1712 = vsel %vm1589, %v1711, %v1687
        %v1713 = vsel %vm1588, %v1579, %v1710
        %v1714 = vsel %vm1588, 0, %v1712
        %v1715 = vmul.f32 %v1713, %v1713
        %v1716 = vmul.f32 %v1715, -0.001358992
        %v1717 = vadd.f32 %v1716, 0.041655596
        %v1718 = vmul.f32 %v1715, %v1717
        %v1719 = vadd.f32 %v1718, -0.4999988
        %v1720 = vmul.f32 %v1715, %v1719
        %v1721 = vadd.f32 1.0, %v1720
        %v1722 = vmul.f32 %v1713, %v1713
        %v1723 = vmul.f32 %v1722, -0.00019511016
        %v1724 = vadd.f32 %v1723, 0.008332121
        %v1725 = vmul.f32 %v1722, %v1724
        %v1726 = vadd.f32 %v1725, -0.16666654
        %v1727 = vmul.f32 %v1722, %v1726
        %v1728 = vadd.f32 %v1727, 1.0
        %v1729 = vmul.f32 %v1728, %v1713
        %vm1730 = vweird.f32 %v1579
        %v1731 = vadd.s32 %v1714, 3
        %v1732 = vand.u32 %v1731, 3
        %vm1733 = vcmp.lt.s32.totalorder %v1732, 2
        %vm1734 = vcmp.eq.s32.totalorder %v1732, 0
        %v1735 = vxor.u32 %v1729, 2147483648
        %v1736 = vsel %vm1734, %v1721, %v1735
        %vm1737 = vcmp.eq.s32.totalorder %v1732, 2
        %v1738 = vxor.u32 %v1721, 2147483648
        %v1739 = vsel %vm1737, %v1738, %v1729
        %v1740 = vsel %vm1733, %v1736, %v1739
        %v1741 = vsel %vm1730, nan, %v1740
        %v1742 = vand.u32 2147483647, %v1580
        %vm1743 = vcmp.le.f32.partialorder %v1742, 0.7853982
        %vm1744 = vcmp.lt.s32.totalorder %v1580, 0
        %v1745 = vand.u32 %v1580, 2139095040
        %v1746 = vshrl.u32 %v1745, 23
        %v1747 = vsub.s32 %v1746, 127
        %v1748 = vand.u32 2147483647, %v1580
        %v1749 = vand.u32 %v1748, 8388607
        %v1750 = vor.u32 %v1749, 8388608
        %v1751 = vsub.s32 0, %v1750
        %v1752 = vadd.s32 %v1747, 1
        %vm1753 = vcmp.gt.s32.totalorder %v1752, 0
        %v1754 = vsel %vm1753, %v1752, 0
        %v1755 = vshrl.u32 %v1754, 5
        %v1756 = vand.u32 %v1754, 31
        %v1757 = vsub.s32 32, %v1756
        %v1758 = vshrl.u32 683565275, %v1757
        %v1759 = vshll.u32 683565275, %v1756
        %v1760 = vshrl.u32 2475754826, %v1757
        %v1761 = vor.u32 %v1759, %v1760
        %v1762 = vshll.u32 2475754826, %v1756
        %v1763 = vshrl.u32 2131351028, %v1757
        %v1764 = vor.u32 %v1762, %v1763
        %v1765 = vshll.u32 2131351028, %v1756
        %v1766 = vshrl.u32 2102212464, %v1757
        %v1767 = vor.u32 %v1765, %v1766
        %v1768 = vshll.u32 2102212464, %v1756
        %v1769 = vshrl.u32 920167782, %v1757
        %v1770 = vor.u32 %v1768, %v1769
        %v1771 = vshll.u32 920167782, %v1756
        %v1772 = vshrl.u32 1326507024, %v1757
        %v1773 = vor.u32 %v1771, %v1772
        %vm1774 = vcmp.lt.s32.totalorder %v1755, 1
        %vm1775 = vcmp.lt.s32.totalorder %v1755, 2
        %vm1776 = vcmp.lt.s32.totalorder %v1755, 3
        %vm1777 = vcmp.lt.s32.totalorder %v1755, 4
        %v1778 = vsel %vm1774, %v1758, %v1761
        %v1779 = vsel %vm1777, %v1767, 2102212464
        %v1780 = vsel %vm1776, %v1764, %v1779
        %v1781 = vsel %vm1775, %v1778, %v1780
        %v1782 = vsel %vm1774, %v1761, %v1764
        %v1783 = vsel %vm1777, %v1770, 920167782
        %v1784 = vsel %vm1776, %v1767, %v1783
        %v1785 = vsel %vm1775, %v1782, %v1784
        %v1786 = vsel %vm1774, %v1764, %v1767
        %v1787 = vsel %vm1777, %v1773, 1326507024
        %v1788 = vsel %vm1776, %v1770, %v1787
        %v1789 = vsel %vm1775, %v1786, %v1788
        %v1790 = vshll.u32 %v1750, 8
        %v1791 = vand.u32 %v1790, 65535
        %v1792 = vshrl.u32 %v1790, 16
        %v1793 = vand.u32 %v1789, 65535
        %v1794 = vshrl.u32 %v1789, 16
        %v1795 = vmul.u32 %v1791, %v1793
        %v1796 = vmul.u32 %v1791, %v1794
        %v1797 = vmul.u32 %v1792, %v1793
        %v1798 = vmul.u32 %v1792, %v1794
        %v1799 = vshll.u32 %v1796, 16
        %v1800 = vshrl.u32 %v1796, 16
        %v1801 = vshll.u32 %v1797, 16
        %v1802 = vshrl.u32 %v1797, 16
        %vm1803 = vc.u32 %v1795, %v1799
        %v1804 = vsel %vm1803, 1, 0
        %v1805 = vadd.s32 %v1795, %v1799
        %v1806 = vadd.s32 %v1798, %v1804
        %vm1807 = vc.u32 %v1805, %v1801
        %v1808 = vsel %vm1807, 1, 0
        %v1809 = vadd.s32 %v1805, %v1801
        %v1810 = vadd.s32 %v1806, %v1808
        %v1811 = vadd.s32 %v1810, %v1800
        %v1812 = vadd.s32 %v1811, %v1802
        %v1813 = vand.u32 %v1790, 65535
        %v1814 = vshrl.u32 %v1790, 16
        %v1815 = vand.u32 %v1785, 65535
        %v1816 = vshrl.u32 %v1785, 16
        %v1817 = vmul.u32 %v1813, %v1815
        %v1818 = vmul.u32 %v1813, %v1816
        %v1819 = vmul.u32 %v1814, %v1815
        %v1820 = vmul.u32 %v1814, %v1816
        %v1821 = vshll.u32 %v1818, 16
        %v1822 = vshrl.u32 %v1818, 16
        %v1823 = vshll.u32 %v1819, 16
        %v1824 = vshrl.u32 %v1819, 16
        %vm1825 = vc.u32 %v1817, %v1821
        %v1826 = vsel %vm1825, 1, 0
        %v1827 = vadd.s32 %v1817, %v1821
        %v1828 = vadd.s32 %v1820, %v1826
        %vm1829 = vc.u32 %v1827, %v1823
        %v1830 = vsel %vm1829, 1, 0
        %v1831 = vadd.s32 %v1827, %v1823
        %v1832 = vadd.s32 %v1828, %v1830
        %v1833 = vadd.s32 %v1832, %v1822
        %v1834 = vadd.s32 %v1833, %v1824
        %v1835 = vmul.u32 %v1790, %v1781
        %v1836 = vadd.s32 %v1812, %v1831
        %vm1837 = vc.u32 %v1812, %v1831
        %v1838 = vadd.s32 %v1834, 1
        %v1839 = vsel %vm1837, %v1838, %v1834
        %v1840 = vadd.s32 %v1835, %v1839
        %v1841 = vadd.s32 %v1840, 536870912
        %v1842 = vshrl.u32 %v1841, 30
        %v1843 = vshll.u32 %v1842, 30
        %v1844 = vsub.s32 %v1840, %v1843
        %vm1845 = vcmp.lt.s32.totalorder %v1844, 0
        %v1846 = vsub.s32 0, %v1844
        %v1847 = vsel %vm1845, %v1846, %v1844
        %v1848 = vclz %v1847
        %v1849 = vsub.s32 %v1848, 2
        %vm1850 = vcmp.gt.s32.totalorder 0, %v1849
        %v1851 = vsel %vm1850, 0, %v1849
        %v1852 = vsub.s32 32, %v1851
        %v1853 = vshll.u32 %v1844, %v1851
        %v1854 = vshrl.u32 %v1836, %v1852
        %v1855 = vor.u32 %v1853, %v1854
        %v1856 = vsub.s32 4294967266, %v1851
        %v1857 = vadd.s32 %v1856, 127
        %v1858 = vshll.u32 %v1857, 23
        %v1859 = vor.u32 4788187, %v1858
        %v1860 = vand.u32 2147483647, %v1859
        %v1862 = vcvt.s32.f32 %v1855
        %v1863 = vmul.f32 %v1862, %v1860
        %v1864 = vxor.u32 %v1863, 2147483648
        %v1865 = vsel %vm1744, %v1864, %v1863
        %v1866 = vsub.s32 4, %v1842
        %v1867 = vsel %vm1744, %v1866, %v1842
        %v1868 = vsel %vm1743, %v1580, %v1865
        %v1869 = vsel %vm1743, 0, %v1867
        %v1870 = vmul.f32 %v1868, %v1868
        %v1871 = vmul.f32 %v1870, -0.001358992
        %v1872 = vadd.f32 %v1871, 0.041655596
        %v1873 = vmul.f32 %v1870, %v1872
        %v1874 = vadd.f32 %v1873, -0.4999988
        %v1875 = vmul.f32 %v1870, %v1874
        %v1876 = vadd.f32 1.0, %v1875
        %v1877 = vmul.f32 %v1868, %v1868
        %v1878 = vmul.f32 %v1877, -0.00019511016
        %v1879 = vadd.f32 %v1878, 0.008332121
        %v1880 = vmul.f32 %v1877, %v1879
        %v1881 = vadd.f32 %v1880, -0.16666654
        %v1882 = vmul.f32 %v1877, %v1881
        %v1883 = vadd.f32 %v1882, 1.0
        %v1884 = vmul.f32 %v1883, %v1868
        %vm1885 = vweird.f32 %v1580
        %v1886 = vadd.s32 %v1869, 3
        %v1887 = vand.u32 %v1886, 3
        %vm1888 = vcmp.lt.s32.totalorder %v1887, 2
        %vm1889 = vcmp.eq.s32.totalorder %v1887, 0
        %v1890 = vxor.u32 %v1884, 2147483648
        %v1891 = vsel %vm1889, %v1876, %v1890
        %vm1892 = vcmp.eq.s32.totalorder %v1887, 2
        %v1893 = vxor.u32 %v1876, 2147483648
        %v1894 = vsel %vm1892, %v1893, %v1884
        %v1895 = vsel %vm1888, %v1891, %v1894
        %v1896 = vsel %vm1885, nan, %v1895
        %v1897 = vand.u32 2147483647, %v1581
        %vm1898 = vcmp.le.f32.partialorder %v1897, 0.7853982
        %vm1899 = vcmp.lt.s32.totalorder %v1581, 0
        %v1900 = vand.u32 %v1581, 2139095040
        %v1901 = vshrl.u32 %v1900, 23
        %v1902 = vsub.s32 %v1901, 127
        %v1903 = vand.u32 2147483647, %v1581
        %v1904 = vand.u32 %v1903, 8388607
        %v1905 = vor.u32 %v1904, 8388608
        %v1906 = vsub.s32 0, %v1905
        %v1907 = vadd.s32 %v1902, 1
        %vm1908 = vcmp.gt.s32.totalorder %v1907, 0
        %v1909 = vsel %vm1908, %v1907, 0
        %v1910 = vshrl.u32 %v1909, 5
        %v1911 = vand.u32 %v1909, 31
        %v1912 = vsub.s32 32, %v1911
        %v1913 = vshrl.u32 683565275, %v1912
        %v1914 = vshll.u32 683565275, %v1911
        %v1915 = vshrl.u32 2475754826, %v1912
        %v1916 = vor.u32 %v1914, %v1915
        %v1917 = vshll.u32 2475754826, %v1911
        %v1918 = vshrl.u32 2131351028, %v1912
        %v1919 = vor.u32 %v1917, %v1918
        %v1920 = vshll.u32 2131351028, %v1911
        %v1921 = vshrl.u32 2102212464, %v1912
        %v1922 = vor.u32 %v1920, %v1921
        %v1923 = vshll.u32 2102212464, %v1911
        %v1924 = vshrl.u32 920167782, %v1912
        %v1925 = vor.u32 %v1923, %v1924
        %v1926 = vshll.u32 920167782, %v1911
        %v1927 = vshrl.u32 1326507024, %v1912
        %v1928 = vor.u32 %v1926, %v1927
        %vm1929 = vcmp.lt.s32.totalorder %v1910, 1
        %vm1930 = vcmp.lt.s32.totalorder %v1910, 2
        %vm1931 = vcmp.lt.s32.totalorder %v1910, 3
        %vm1932 = vcmp.lt.s32.totalorder %v1910, 4
        %v1933 = vsel %vm1929, %v1913, %v1916
        %v1934 = vsel %vm1932, %v1922, 2102212464
        %v1935 = vsel %vm1931, %v1919, %v1934
        %v1936 = vsel %vm1930, %v1933, %v1935
        %v1937 = vsel %vm1929, %v1916, %v1919
        %v1938 = vsel %vm1932, %v1925, 920167782
        %v1939 = vsel %vm1931, %v1922, %v1938
        %v1940 = vsel %vm1930, %v1937, %v1939
        %v1941 = vsel %vm1929, %v1919, %v1922
        %v1942 = vsel %vm1932, %v1928, 1326507024
        %v1943 = vsel %vm1931, %v1925, %v1942
        %v1944 = vsel %vm1930, %v1941, %v1943
        %v1945 = vshll.u32 %v1905, 8
        %v1946 = vand.u32 %v1945, 65535
        %v1947 = vshrl.u32 %v1945, 16
        %v1948 = vand.u32 %v1944, 65535
        %v1949 = vshrl.u32 %v1944, 16
        %v1950 = vmul.u32 %v1946, %v1948
        %v1951 = vmul.u32 %v1946, %v1949
        %v1952 = vmul.u32 %v1947, %v1948
        %v1953 = vmul.u32 %v1947, %v1949
        %v1954 = vshll.u32 %v1951, 16
        %v1955 = vshrl.u32 %v1951, 16
        %v1956 = vshll.u32 %v1952, 16
        %v1957 = vshrl.u32 %v1952, 16
        %vm1958 = vc.u32 %v1950, %v1954
        %v1959 = vsel %vm1958, 1, 0
        %v1960 = vadd.s32 %v1950, %v1954
        %v1961 = vadd.s32 %v1953, %v1959
        %vm1962 = vc.u32 %v1960, %v1956
        %v1963 = vsel %vm1962, 1, 0
        %v1964 = vadd.s32 %v1960, %v1956
        %v1965 = vadd.s32 %v1961, %v1963
        %v1966 = vadd.s32 %v1965, %v1955
        %v1967 = vadd.s32 %v1966, %v1957
        %v1968 = vand.u32 %v1945, 65535
        %v1969 = vshrl.u32 %v1945, 16
        %v1970 = vand.u32 %v1940, 65535
        %v1971 = vshrl.u32 %v1940, 16
        %v1972 = vmul.u32 %v1968, %v1970
        %v1973 = vmul.u32 %v1968, %v1971
        %v1974 = vmul.u32 %v1969, %v1970
        %v1975 = vmul.u32 %v1969, %v1971
        %v1976 = vshll.u32 %v1973, 16
        %v1977 = vshrl.u32 %v1973, 16
        %v1978 = vshll.u32 %v1974, 16
        %v1979 = vshrl.u32 %v1974, 16
        %vm1980 = vc.u32 %v1972, %v1976
        %v1981 = vsel %vm1980, 1, 0
        %v1982 = vadd.s32 %v1972, %v1976
        %v1983 = vadd.s32 %v1975, %v1981
        %vm1984 = vc.u32 %v1982, %v1978
        %v1985 = vsel %vm1984, 1, 0
        %v1986 = vadd.s32 %v1982, %v1978
        %v1987 = vadd.s32 %v1983, %v1985
        %v1988 = vadd.s32 %v1987, %v1977
        %v1989 = vadd.s32 %v1988, %v1979
        %v1990 = vmul.u32 %v1945, %v1936
        %v1991 = vadd.s32 %v1967, %v1986
        %vm1992 = vc.u32 %v1967, %v1986
        %v1993 = vadd.s32 %v1989, 1
        %v1994 = vsel %vm1992, %v1993, %v1989
        %v1995 = vadd.s32 %v1990, %v1994
        %v1996 = vadd.s32 %v1995, 536870912
        %v1997 = vshrl.u32 %v1996, 30
        %v1998 = vshll.u32 %v1997, 30
        %v1999 = vsub.s32 %v1995, %v1998
        %vm2000 = vcmp.lt.s32.totalorder %v1999, 0
        %v2001 = vsub.s32 0, %v1999
        %v2002 = vsel %vm2000, %v2001, %v1999
        %v2003 = vclz %v2002
        %v2004 = vsub.s32 %v2003, 2
        %vm2005 = vcmp.gt.s32.totalorder 0, %v2004
        %v2006 = vsel %vm2005, 0, %v2004
        %v2007 = vsub.s32 32, %v2006
        %v2008 = vshll.u32 %v1999, %v2006
        %v2009 = vshrl.u32 %v1991, %v2007
        %v2010 = vor.u32 %v2008, %v2009
        %v2011 = vsub.s32 4294967266, %v2006
        %v2012 = vadd.s32 %v2011, 127
        %v2013 = vshll.u32 %v2012, 23
        %v2014 = vor.u32 4788187, %v2013
        %v2015 = vand.u32 2147483647, %v2014
        %v2017 = vcvt.s32.f32 %v2010
        %v2018 = vmul.f32 %v2017, %v2015
        %v2019 = vxor.u32 %v2018, 2147483648
        %v2020 = vsel %vm1899, %v2019, %v2018
        %v2021 = vsub.s32 4, %v1997
        %v2022 = vsel %vm1899, %v2021, %v1997
        %v2023 = vsel %vm1898, %v1581, %v2020
        %v2024 = vsel %vm1898, 0, %v2022
        %v2025 = vmul.f32 %v2023, %v2023
        %v2026 = vmul.f32 %v2025, -0.001358992
        %v2027 = vadd.f32 %v2026, 0.041655596
        %v2028 = vmul.f32 %v2025, %v2027
        %v2029 = vadd.f32 %v2028, -0.4999988
        %v2030 = vmul.f32 %v2025, %v2029
        %v2031 = vadd.f32 1.0, %v2030
        %v2032 = vmul.f32 %v2023, %v2023
        %v2033 = vmul.f32 %v2032, -0.00019511016
        %v2034 = vadd.f32 %v2033, 0.008332121
        %v2035 = vmul.f32 %v2032, %v2034
        %v2036 = vadd.f32 %v2035, -0.16666654
        %v2037 = vmul.f32 %v2032, %v2036
        %v2038 = vadd.f32 %v2037, 1.0
        %v2039 = vmul.f32 %v2038, %v2023
        %vm2040 = vweird.f32 %v1581
        %v2041 = vadd.s32 %v2024, 3
        %v2042 = vand.u32 %v2041, 3
        %vm2043 = vcmp.lt.s32.totalorder %v2042, 2
        %vm2044 = vcmp.eq.s32.totalorder %v2042, 0
        %v2045 = vxor.u32 %v2039, 2147483648
        %v2046 = vsel %vm2044, %v2031, %v2045
        %vm2047 = vcmp.eq.s32.totalorder %v2042, 2
        %v2048 = vxor.u32 %v2031, 2147483648
        %v2049 = vsel %vm2047, %v2048, %v2039
        %v2050 = vsel %vm2043, %v2046, %v2049
        %v2051 = vsel %vm2040, nan, %v2050
        %v2052 = vand.u32 2147483647, %v1582
        %vm2053 = vcmp.le.f32.partialorder %v2052, 0.7853982
        %vm2054 = vcmp.lt.s32.totalorder %v1582, 0
        %v2055 = vand.u32 %v1582, 2139095040
        %v2056 = vshrl.u32 %v2055, 23
        %v2057 = vsub.s32 %v2056, 127
        %v2058 = vand.u32 2147483647, %v1582
        %v2059 = vand.u32 %v2058, 8388607
        %v2060 = vor.u32 %v2059, 8388608
        %v2061 = vsub.s32 0, %v2060
        %v2062 = vadd.s32 %v2057, 1
        %vm2063 = vcmp.gt.s32.totalorder %v2062, 0
        %v2064 = vsel %vm2063, %v2062, 0
        %v2065 = vshrl.u32 %v2064, 5
        %v2066 = vand.u32 %v2064, 31
        %v2067 = vsub.s32 32, %v2066
        %v2068 = vshrl.u32 683565275, %v2067
        %v2069 = vshll.u32 683565275, %v2066
        %v2070 = vshrl.u32 2475754826, %v2067
        %v2071 = vor.u32 %v2069, %v2070
        %v2072 = vshll.u32 2475754826, %v2066
        %v2073 = vshrl.u32 2131351028, %v2067
        %v2074 = vor.u32 %v2072, %v2073
        %v2075 = vshll.u32 2131351028, %v2066
        %v2076 = vshrl.u32 2102212464, %v2067
        %v2077 = vor.u32 %v2075, %v2076
        %v2078 = vshll.u32 2102212464, %v2066
        %v2079 = vshrl.u32 920167782, %v2067
        %v2080 = vor.u32 %v2078, %v2079
        %v2081 = vshll.u32 920167782, %v2066
        %v2082 = vshrl.u32 1326507024, %v2067
        %v2083 = vor.u32 %v2081, %v2082
        %vm2084 = vcmp.lt.s32.totalorder %v2065, 1
        %vm2085 = vcmp.lt.s32.totalorder %v2065, 2
        %vm2086 = vcmp.lt.s32.totalorder %v2065, 3
        %vm2087 = vcmp.lt.s32.totalorder %v2065, 4
        %v2088 = vsel %vm2084, %v2068, %v2071
        %v2089 = vsel %vm2087, %v2077, 2102212464
        %v2090 = vsel %vm2086, %v2074, %v2089
        %v2091 = vsel %vm2085, %v2088, %v2090
        %v2092 = vsel %vm2084, %v2071, %v2074
        %v2093 = vsel %vm2087, %v2080, 920167782
        %v2094 = vsel %vm2086, %v2077, %v2093
        %v2095 = vsel %vm2085, %v2092, %v2094
        %v2096 = vsel %vm2084, %v2074, %v2077
        %v2097 = vsel %vm2087, %v2083, 1326507024
        %v2098 = vsel %vm2086, %v2080, %v2097
        %v2099 = vsel %vm2085, %v2096, %v2098
        %v2100 = vshll.u32 %v2060, 8
        %v2101 = vand.u32 %v2100, 65535
        %v2102 = vshrl.u32 %v2100, 16
        %v2103 = vand.u32 %v2099, 65535
        %v2104 = vshrl.u32 %v2099, 16
        %v2105 = vmul.u32 %v2101, %v2103
        %v2106 = vmul.u32 %v2101, %v2104
        %v2107 = vmul.u32 %v2102, %v2103
        %v2108 = vmul.u32 %v2102, %v2104
        %v2109 = vshll.u32 %v2106, 16
        %v2110 = vshrl.u32 %v2106, 16
        %v2111 = vshll.u32 %v2107, 16
        %v2112 = vshrl.u32 %v2107, 16
        %vm2113 = vc.u32 %v2105, %v2109
        %v2114 = vsel %vm2113, 1, 0
        %v2115 = vadd.s32 %v2105, %v2109
        %v2116 = vadd.s32 %v2108, %v2114
        %vm2117 = vc.u32 %v2115, %v2111
        %v2118 = vsel %vm2117, 1, 0
        %v2119 = vadd.s32 %v2115, %v2111
        %v2120 = vadd.s32 %v2116, %v2118
        %v2121 = vadd.s32 %v2120, %v2110
        %v2122 = vadd.s32 %v2121, %v2112
        %v2123 = vand.u32 %v2100, 65535
        %v2124 = vshrl.u32 %v2100, 16
        %v2125 = vand.u32 %v2095, 65535
        %v2126 = vshrl.u32 %v2095, 16
        %v2127 = vmul.u32 %v2123, %v2125
        %v2128 = vmul.u32 %v2123, %v2126
        %v2129 = vmul.u32 %v2124, %v2125
        %v2130 = vmul.u32 %v2124, %v2126
        %v2131 = vshll.u32 %v2128, 16
        %v2132 = vshrl.u32 %v2128, 16
        %v2133 = vshll.u32 %v2129, 16
        %v2134 = vshrl.u32 %v2129, 16
        %vm2135 = vc.u32 %v2127, %v2131
        %v2136 = vsel %vm2135, 1, 0
        %v2137 = vadd.s32 %v2127, %v2131
        %v2138 = vadd.s32 %v2130, %v2136
        %vm2139 = vc.u32 %v2137, %v2133
        %v2140 = vsel %vm2139, 1, 0
        %v2141 = vadd.s32 %v2137, %v2133
        %v2142 = vadd.s32 %v2138, %v2140
        %v2143 = vadd.s32 %v2142, %v2132
        %v2144 = vadd.s32 %v2143, %v2134
        %v2145 = vmul.u32 %v2100, %v2091
        %v2146 = vadd.s32 %v2122, %v2141
        %vm2147 = vc.u32 %v2122, %v2141
        %v2148 = vadd.s32 %v2144, 1
        %v2149 = vsel %vm2147, %v2148, %v2144
        %v2150 = vadd.s32 %v2145, %v2149
        %v2151 = vadd.s32 %v2150, 536870912
        %v2152 = vshrl.u32 %v2151, 30
        %v2153 = vshll.u32 %v2152, 30
        %v2154 = vsub.s32 %v2150, %v2153
        %vm2155 = vcmp.lt.s32.totalorder %v2154, 0
        %v2156 = vsub.s32 0, %v2154
        %v2157 = vsel %vm2155, %v2156, %v2154
        %v2158 = vclz %v2157
        %v2159 = vsub.s32 %v2158, 2
        %vm2160 = vcmp.gt.s32.totalorder 0, %v2159
        %v2161 = vsel %vm2160, 0, %v2159
        %v2162 = vsub.s32 32, %v2161
        %v2163 = vshll.u32 %v2154, %v2161
        %v2164 = vshrl.u32 %v2146, %v2162
        %v2165 = vor.u32 %v2163, %v2164
        %v2166 = vsub.s32 4294967266, %v2161
        %v2167 = vadd.s32 %v2166, 127
        %v2168 = vshll.u32 %v2167, 23
        %v2169 = vor.u32 4788187, %v2168
        %v2170 = vand.u32 2147483647, %v2169
        %v2172 = vcvt.s32.f32 %v2165
        %v2173 = vmul.f32 %v2172, %v2170
        %v2174 = vxor.u32 %v2173, 2147483648
        %v2175 = vsel %vm2054, %v2174, %v2173
        %v2176 = vsub.s32 4, %v2152
        %v2177 = vsel %vm2054, %v2176, %v2152
        %v2178 = vsel %vm2053, %v1582, %v2175
        %v2179 = vsel %vm2053, 0, %v2177
        %v2180 = vmul.f32 %v2178, %v2178
        %v2181 = vmul.f32 %v2180, -0.001358992
        %v2182 = vadd.f32 %v2181, 0.041655596
        %v2183 = vmul.f32 %v2180, %v2182
        %v2184 = vadd.f32 %v2183, -0.4999988
        %v2185 = vmul.f32 %v2180, %v2184
        %v2186 = vadd.f32 1.0, %v2185
        %v2187 = vmul.f32 %v2178, %v2178
        %v2188 = vmul.f32 %v2187, -0.00019511016
        %v2189 = vadd.f32 %v2188, 0.008332121
        %v2190 = vmul.f32 %v2187, %v2189
        %v2191 = vadd.f32 %v2190, -0.16666654
        %v2192 = vmul.f32 %v2187, %v2191
        %v2193 = vadd.f32 %v2192, 1.0
        %v2194 = vmul.f32 %v2193, %v2178
        %vm2195 = vweird.f32 %v1582
        %v2196 = vadd.s32 %v2179, 3
        %v2197 = vand.u32 %v2196, 3
        %vm2198 = vcmp.lt.s32.totalorder %v2197, 2
        %vm2199 = vcmp.eq.s32.totalorder %v2197, 0
        %v2200 = vxor.u32 %v2194, 2147483648
        %v2201 = vsel %vm2199, %v2186, %v2200
        %vm2202 = vcmp.eq.s32.totalorder %v2197, 2
        %v2203 = vxor.u32 %v2186, 2147483648
        %v2204 = vsel %vm2202, %v2203, %v2194
        %v2205 = vsel %vm2198, %v2201, %v2204
        %v2206 = vsel %vm2195, nan, %v2205
        %v2207 = vand.u32 2147483647, %v1583
        %vm2208 = vcmp.le.f32.partialorder %v2207, 0.7853982
        %vm2209 = vcmp.lt.s32.totalorder %v1583, 0
        %v2210 = vand.u32 %v1583, 2139095040
        %v2211 = vshrl.u32 %v2210, 23
        %v2212 = vsub.s32 %v2211, 127
        %v2213 = vand.u32 2147483647, %v1583
        %v2214 = vand.u32 %v2213, 8388607
        %v2215 = vor.u32 %v2214, 8388608
        %v2216 = vsub.s32 0, %v2215
        %v2217 = vadd.s32 %v2212, 1
        %vm2218 = vcmp.gt.s32.totalorder %v2217, 0
        %v2219 = vsel %vm2218, %v2217, 0
        %v2220 = vshrl.u32 %v2219, 5
        %v2221 = vand.u32 %v2219, 31
        %v2222 = vsub.s32 32, %v2221
        %v2223 = vshrl.u32 683565275, %v2222
        %v2224 = vshll.u32 683565275, %v2221
        %v2225 = vshrl.u32 2475754826, %v2222
        %v2226 = vor.u32 %v2224, %v2225
        %v2227 = vshll.u32 2475754826, %v2221
        %v2228 = vshrl.u32 2131351028, %v2222
        %v2229 = vor.u32 %v2227, %v2228
        %v2230 = vshll.u32 2131351028, %v2221
        %v2231 = vshrl.u32 2102212464, %v2222
        %v2232 = vor.u32 %v2230, %v2231
        %v2233 = vshll.u32 2102212464, %v2221
        %v2234 = vshrl.u32 920167782, %v2222
        %v2235 = vor.u32 %v2233, %v2234
        %v2236 = vshll.u32 920167782, %v2221
        %v2237 = vshrl.u32 1326507024, %v2222
        %v2238 = vor.u32 %v2236, %v2237
        %vm2239 = vcmp.lt.s32.totalorder %v2220, 1
        %vm2240 = vcmp.lt.s32.totalorder %v2220, 2
        %vm2241 = vcmp.lt.s32.totalorder %v2220, 3
        %vm2242 = vcmp.lt.s32.totalorder %v2220, 4
        %v2243 = vsel %vm2239, %v2223, %v2226
        %v2244 = vsel %vm2242, %v2232, 2102212464
        %v2245 = vsel %vm2241, %v2229, %v2244
        %v2246 = vsel %vm2240, %v2243, %v2245
        %v2247 = vsel %vm2239, %v2226, %v2229
        %v2248 = vsel %vm2242, %v2235, 920167782
        %v2249 = vsel %vm2241, %v2232, %v2248
        %v2250 = vsel %vm2240, %v2247, %v2249
        %v2251 = vsel %vm2239, %v2229, %v2232
        %v2252 = vsel %vm2242, %v2238, 1326507024
        %v2253 = vsel %vm2241, %v2235, %v2252
        %v2254 = vsel %vm2240, %v2251, %v2253
        %v2255 = vshll.u32 %v2215, 8
        %v2256 = vand.u32 %v2255, 65535
        %v2257 = vshrl.u32 %v2255, 16
        %v2258 = vand.u32 %v2254, 65535
        %v2259 = vshrl.u32 %v2254, 16
        %v2260 = vmul.u32 %v2256, %v2258
        %v2261 = vmul.u32 %v2256, %v2259
        %v2262 = vmul.u32 %v2257, %v2258
        %v2263 = vmul.u32 %v2257, %v2259
        %v2264 = vshll.u32 %v2261, 16
        %v2265 = vshrl.u32 %v2261, 16
        %v2266 = vshll.u32 %v2262, 16
        %v2267 = vshrl.u32 %v2262, 16
        %vm2268 = vc.u32 %v2260, %v2264
        %v2269 = vsel %vm2268, 1, 0
        %v2270 = vadd.s32 %v2260, %v2264
        %v2271 = vadd.s32 %v2263, %v2269
        %vm2272 = vc.u32 %v2270, %v2266
        %v2273 = vsel %vm2272, 1, 0
        %v2274 = vadd.s32 %v2270, %v2266
        %v2275 = vadd.s32 %v2271, %v2273
        %v2276 = vadd.s32 %v2275, %v2265
        %v2277 = vadd.s32 %v2276, %v2267
        %v2278 = vand.u32 %v2255, 65535
        %v2279 = vshrl.u32 %v2255, 16
        %v2280 = vand.u32 %v2250, 65535
        %v2281 = vshrl.u32 %v2250, 16
        %v2282 = vmul.u32 %v2278, %v2280
        %v2283 = vmul.u32 %v2278, %v2281
        %v2284 = vmul.u32 %v2279, %v2280
        %v2285 = vmul.u32 %v2279, %v2281
        %v2286 = vshll.u32 %v2283, 16
        %v2287 = vshrl.u32 %v2283, 16
        %v2288 = vshll.u32 %v2284, 16
        %v2289 = vshrl.u32 %v2284, 16
        %vm2290 = vc.u32 %v2282, %v2286
        %v2291 = vsel %vm2290, 1, 0
        %v2292 = vadd.s32 %v2282, %v2286
        %v2293 = vadd.s32 %v2285, %v2291
        %vm2294 = vc.u32 %v2292, %v2288
        %v2295 = vsel %vm2294, 1, 0
        %v2296 = vadd.s32 %v2292, %v2288
        %v2297 = vadd.s32 %v2293, %v2295
        %v2298 = vadd.s32 %v2297, %v2287
        %v2299 = vadd.s32 %v2298, %v2289
        %v2300 = vmul.u32 %v2255, %v2246
        %v2301 = vadd.s32 %v2277, %v2296
        %vm2302 = vc.u32 %v2277, %v2296
        %v2303 = vadd.s32 %v2299, 1
        %v2304 = vsel %vm2302, %v2303, %v2299
        %v2305 = vadd.s32 %v2300, %v2304
        %v2306 = vadd.s32 %v2305, 536870912
        %v2307 = vshrl.u32 %v2306, 30
        %v2308 = vshll.u32 %v2307, 30
        %v2309 = vsub.s32 %v2305, %v2308
        %vm2310 = vcmp.lt.s32.totalorder %v2309, 0
        %v2311 = vsub.s32 0, %v2309
        %v2312 = vsel %vm2310, %v2311, %v2309
        %v2313 = vclz %v2312
        %v2314 = vsub.s32 %v2313, 2
        %vm2315 = vcmp.gt.s32.totalorder 0, %v2314
        %v2316 = vsel %vm2315, 0, %v2314
        %v2317 = vsub.s32 32, %v2316
        %v2318 = vshll.u32 %v2309, %v2316
        %v2319 = vshrl.u32 %v2301, %v2317
        %v2320 = vor.u32 %v2318, %v2319
        %v2321 = vsub.s32 4294967266, %v2316
        %v2322 = vadd.s32 %v2321, 127
        %v2323 = vshll.u32 %v2322, 23
        %v2324 = vor.u32 4788187, %v2323
        %v2325 = vand.u32 2147483647, %v2324
        %v2327 = vcvt.s32.f32 %v2320
        %v2328 = vmul.f32 %v2327, %v2325
        %v2329 = vxor.u32 %v2328, 2147483648
        %v2330 = vsel %vm2209, %v2329, %v2328
        %v2331 = vsub.s32 4, %v2307
        %v2332 = vsel %vm2209, %v2331, %v2307
        %v2333 = vsel %vm2208, %v1583, %v2330
        %v2334 = vsel %vm2208, 0, %v2332
        %v2335 = vmul.f32 %v2333, %v2333
        %v2336 = vmul.f32 %v2335, -0.001358992
        %v2337 = vadd.f32 %v2336, 0.041655596
        %v2338 = vmul.f32 %v2335, %v2337
        %v2339 = vadd.f32 %v2338, -0.4999988
        %v2340 = vmul.f32 %v2335, %v2339
        %v2341 = vadd.f32 1.0, %v2340
        %v2342 = vmul.f32 %v2333, %v2333
        %v2343 = vmul.f32 %v2342, -0.00019511016
        %v2344 = vadd.f32 %v2343, 0.008332121
        %v2345 = vmul.f32 %v2342, %v2344
        %v2346 = vadd.f32 %v2345, -0.16666654
        %v2347 = vmul.f32 %v2342, %v2346
        %v2348 = vadd.f32 %v2347, 1.0
        %v2349 = vmul.f32 %v2348, %v2333
        %vm2350 = vweird.f32 %v1583
        %v2351 = vadd.s32 %v2334, 3
        %v2352 = vand.u32 %v2351, 3
        %vm2353 = vcmp.lt.s32.totalorder %v2352, 2
        %vm2354 = vcmp.eq.s32.totalorder %v2352, 0
        %v2355 = vxor.u32 %v2349, 2147483648
        %v2356 = vsel %vm2354, %v2341, %v2355
        %vm2357 = vcmp.eq.s32.totalorder %v2352, 2
        %v2358 = vxor.u32 %v2341, 2147483648
        %v2359 = vsel %vm2357, %v2358, %v2349
        %v2360 = vsel %vm2353, %v2356, %v2359
        %v2361 = vsel %vm2350, nan, %v2360
        %v2362 = vand.u32 2147483647, %v1584
        %vm2363 = vcmp.le.f32.partialorder %v2362, 0.7853982
        %vm2364 = vcmp.lt.s32.totalorder %v1584, 0
        %v2365 = vand.u32 %v1584, 2139095040
        %v2366 = vshrl.u32 %v2365, 23
        %v2367 = vsub.s32 %v2366, 127
        %v2368 = vand.u32 2147483647, %v1584
        %v2369 = vand.u32 %v2368, 8388607
        %v2370 = vor.u32 %v2369, 8388608
        %v2371 = vsub.s32 0, %v2370
        %v2372 = vadd.s32 %v2367, 1
        %vm2373 = vcmp.gt.s32.totalorder %v2372, 0
        %v2374 = vsel %vm2373, %v2372, 0
        %v2375 = vshrl.u32 %v2374, 5
        %v2376 = vand.u32 %v2374, 31
        %v2377 = vsub.s32 32, %v2376
        %v2378 = vshrl.u32 683565275, %v2377
        %v2379 = vshll.u32 683565275, %v2376
        %v2380 = vshrl.u32 2475754826, %v2377
        %v2381 = vor.u32 %v2379, %v2380
        %v2382 = vshll.u32 2475754826, %v2376
        %v2383 = vshrl.u32 2131351028, %v2377
        %v2384 = vor.u32 %v2382, %v2383
        %v2385 = vshll.u32 2131351028, %v2376
        %v2386 = vshrl.u32 2102212464, %v2377
        %v2387 = vor.u32 %v2385, %v2386
        %v2388 = vshll.u32 2102212464, %v2376
        %v2389 = vshrl.u32 920167782, %v2377
        %v2390 = vor.u32 %v2388, %v2389
        %v2391 = vshll.u32 920167782, %v2376
        %v2392 = vshrl.u32 1326507024, %v2377
        %v2393 = vor.u32 %v2391, %v2392
        %vm2394 = vcmp.lt.s32.totalorder %v2375, 1
        %vm2395 = vcmp.lt.s32.totalorder %v2375, 2
        %vm2396 = vcmp.lt.s32.totalorder %v2375, 3
        %vm2397 = vcmp.lt.s32.totalorder %v2375, 4
        %v2398 = vsel %vm2394, %v2378, %v2381
        %v2399 = vsel %vm2397, %v2387, 2102212464
        %v2400 = vsel %vm2396, %v2384, %v2399
        %v2401 = vsel %vm2395, %v2398, %v2400
        %v2402 = vsel %vm2394, %v2381, %v2384
        %v2403 = vsel %vm2397, %v2390, 920167782
        %v2404 = vsel %vm2396, %v2387, %v2403
        %v2405 = vsel %vm2395, %v2402, %v2404
        %v2406 = vsel %vm2394, %v2384, %v2387
        %v2407 = vsel %vm2397, %v2393, 1326507024
        %v2408 = vsel %vm2396, %v2390, %v2407
        %v2409 = vsel %vm2395, %v2406, %v2408
        %v2410 = vshll.u32 %v2370, 8
        %v2411 = vand.u32 %v2410, 65535
        %v2412 = vshrl.u32 %v2410, 16
        %v2413 = vand.u32 %v2409, 65535
        %v2414 = vshrl.u32 %v2409, 16
        %v2415 = vmul.u32 %v2411, %v2413
        %v2416 = vmul.u32 %v2411, %v2414
        %v2417 = vmul.u32 %v2412, %v2413
        %v2418 = vmul.u32 %v2412, %v2414
        %v2419 = vshll.u32 %v2416, 16
        %v2420 = vshrl.u32 %v2416, 16
        %v2421 = vshll.u32 %v2417, 16
        %v2422 = vshrl.u32 %v2417, 16
        %vm2423 = vc.u32 %v2415, %v2419
        %v2424 = vsel %vm2423, 1, 0
        %v2425 = vadd.s32 %v2415, %v2419
        %v2426 = vadd.s32 %v2418, %v2424
        %vm2427 = vc.u32 %v2425, %v2421
        %v2428 = vsel %vm2427, 1, 0
        %v2429 = vadd.s32 %v2425, %v2421
        %v2430 = vadd.s32 %v2426, %v2428
        %v2431 = vadd.s32 %v2430, %v2420
        %v2432 = vadd.s32 %v2431, %v2422
        %v2433 = vand.u32 %v2410, 65535
        %v2434 = vshrl.u32 %v2410, 16
        %v2435 = vand.u32 %v2405, 65535
        %v2436 = vshrl.u32 %v2405, 16
        %v2437 = vmul.u32 %v2433, %v2435
        %v2438 = vmul.u32 %v2433, %v2436
        %v2439 = vmul.u32 %v2434, %v2435
        %v2440 = vmul.u32 %v2434, %v2436
        %v2441 = vshll.u32 %v2438, 16
        %v2442 = vshrl.u32 %v2438, 16
        %v2443 = vshll.u32 %v2439, 16
        %v2444 = vshrl.u32 %v2439, 16
        %vm2445 = vc.u32 %v2437, %v2441
        %v2446 = vsel %vm2445, 1, 0
        %v2447 = vadd.s32 %v2437, %v2441
        %v2448 = vadd.s32 %v2440, %v2446
        %vm2449 = vc.u32 %v2447, %v2443
        %v2450 = vsel %vm2449, 1, 0
        %v2451 = vadd.s32 %v2447, %v2443
        %v2452 = vadd.s32 %v2448, %v2450
        %v2453 = vadd.s32 %v2452, %v2442
        %v2454 = vadd.s32 %v2453, %v2444
        %v2455 = vmul.u32 %v2410, %v2401
        %v2456 = vadd.s32 %v2432, %v2451
        %vm2457 = vc.u32 %v2432, %v2451
        %v2458 = vadd.s32 %v2454, 1
        %v2459 = vsel %vm2457, %v2458, %v2454
        %v2460 = vadd.s32 %v2455, %v2459
        %v2461 = vadd.s32 %v2460, 536870912
        %v2462 = vshrl.u32 %v2461, 30
        %v2463 = vshll.u32 %v2462, 30
        %v2464 = vsub.s32 %v2460, %v2463
        %vm2465 = vcmp.lt.s32.totalorder %v2464, 0
        %v2466 = vsub.s32 0, %v2464
        %v2467 = vsel %vm2465, %v2466, %v2464
        %v2468 = vclz %v2467
        %v2469 = vsub.s32 %v2468, 2
        %vm2470 = vcmp.gt.s32.totalorder 0, %v2469
        %v2471 = vsel %vm2470, 0, %v2469
        %v2472 = vsub.s32 32, %v2471
        %v2473 = vshll.u32 %v2464, %v2471
        %v2474 = vshrl.u32 %v2456, %v2472
        %v2475 = vor.u32 %v2473, %v2474
        %v2476 = vsub.s32 4294967266, %v2471
        %v2477 = vadd.s32 %v2476, 127
        %v2478 = vshll.u32 %v2477, 23
        %v2479 = vor.u32 4788187, %v2478
        %v2480 = vand.u32 2147483647, %v2479
        %v2482 = vcvt.s32.f32 %v2475
        %v2483 = vmul.f32 %v2482, %v2480
        %v2484 = vxor.u32 %v2483, 2147483648
        %v2485 = vsel %vm2364, %v2484, %v2483
        %v2486 = vsub.s32 4, %v2462
        %v2487 = vsel %vm2364, %v2486, %v2462
        %v2488 = vsel %vm2363, %v1584, %v2485
        %v2489 = vsel %vm2363, 0, %v2487
        %v2490 = vmul.f32 %v2488, %v2488
        %v2491 = vmul.f32 %v2490, -0.001358992
        %v2492 = vadd.f32 %v2491, 0.041655596
        %v2493 = vmul.f32 %v2490, %v2492
        %v2494 = vadd.f32 %v2493, -0.4999988
        %v2495 = vmul.f32 %v2490, %v2494
        %v2496 = vadd.f32 1.0, %v2495
        %v2497 = vmul.f32 %v2488, %v2488
        %v2498 = vmul.f32 %v2497, -0.00019511016
        %v2499 = vadd.f32 %v2498, 0.008332121
        %v2500 = vmul.f32 %v2497, %v2499
        %v2501 = vadd.f32 %v2500, -0.16666654
        %v2502 = vmul.f32 %v2497, %v2501
        %v2503 = vadd.f32 %v2502, 1.0
        %v2504 = vmul.f32 %v2503, %v2488
        %vm2505 = vweird.f32 %v1584
        %v2506 = vadd.s32 %v2489, 3
        %v2507 = vand.u32 %v2506, 3
        %vm2508 = vcmp.lt.s32.totalorder %v2507, 2
        %vm2509 = vcmp.eq.s32.totalorder %v2507, 0
        %v2510 = vxor.u32 %v2504, 2147483648
        %v2511 = vsel %vm2509, %v2496, %v2510
        %vm2512 = vcmp.eq.s32.totalorder %v2507, 2
        %v2513 = vxor.u32 %v2496, 2147483648
        %v2514 = vsel %vm2512, %v2513, %v2504
        %v2515 = vsel %vm2508, %v2511, %v2514
        %v2516 = vsel %vm2505, nan, %v2515
        %v2517 = vand.u32 2147483647, %v1585
        %vm2518 = vcmp.le.f32.partialorder %v2517, 0.7853982
        %vm2519 = vcmp.lt.s32.totalorder %v1585, 0
        %v2520 = vand.u32 %v1585, 2139095040
        %v2521 = vshrl.u32 %v2520, 23
        %v2522 = vsub.s32 %v2521, 127
        %v2523 = vand.u32 2147483647, %v1585
        %v2524 = vand.u32 %v2523, 8388607
        %v2525 = vor.u32 %v2524, 8388608
        %v2526 = vsub.s32 0, %v2525
        %v2527 = vadd.s32 %v2522, 1
        %vm2528 = vcmp.gt.s32.totalorder %v2527, 0
        %v2529 = vsel %vm2528, %v2527, 0
        %v2530 = vshrl.u32 %v2529, 5
        %v2531 = vand.u32 %v2529, 31
        %v2532 = vsub.s32 32, %v2531
        %v2533 = vshrl.u32 683565275, %v2532
        %v2534 = vshll.u32 683565275, %v2531
        %v2535 = vshrl.u32 2475754826, %v2532
        %v2536 = vor.u32 %v2534, %v2535
        %v2537 = vshll.u32 2475754826, %v2531
        %v2538 = vshrl.u32 2131351028, %v2532
        %v2539 = vor.u32 %v2537, %v2538
        %v2540 = vshll.u32 2131351028, %v2531
        %v2541 = vshrl.u32 2102212464, %v2532
        %v2542 = vor.u32 %v2540, %v2541
        %v2543 = vshll.u32 2102212464, %v2531
        %v2544 = vshrl.u32 920167782, %v2532
        %v2545 = vor.u32 %v2543, %v2544
        %v2546 = vshll.u32 920167782, %v2531
        %v2547 = vshrl.u32 1326507024, %v2532
        %v2548 = vor.u32 %v2546, %v2547
        %vm2549 = vcmp.lt.s32.totalorder %v2530, 1
        %vm2550 = vcmp.lt.s32.totalorder %v2530, 2
        %vm2551 = vcmp.lt.s32.totalorder %v2530, 3
        %vm2552 = vcmp.lt.s32.totalorder %v2530, 4
        %v2553 = vsel %vm2549, %v2533, %v2536
        %v2554 = vsel %vm2552, %v2542, 2102212464
        %v2555 = vsel %vm2551, %v2539, %v2554
        %v2556 = vsel %vm2550, %v2553, %v2555
        %v2557 = vsel %vm2549, %v2536, %v2539
        %v2558 = vsel %vm2552, %v2545, 920167782
        %v2559 = vsel %vm2551, %v2542, %v2558
        %v2560 = vsel %vm2550, %v2557, %v2559
        %v2561 = vsel %vm2549, %v2539, %v2542
        %v2562 = vsel %vm2552, %v2548, 1326507024
        %v2563 = vsel %vm2551, %v2545, %v2562
        %v2564 = vsel %vm2550, %v2561, %v2563
        %v2565 = vshll.u32 %v2525, 8
        %v2566 = vand.u32 %v2565, 65535
        %v2567 = vshrl.u32 %v2565, 16
        %v2568 = vand.u32 %v2564, 65535
        %v2569 = vshrl.u32 %v2564, 16
        %v2570 = vmul.u32 %v2566, %v2568
        %v2571 = vmul.u32 %v2566, %v2569
        %v2572 = vmul.u32 %v2567, %v2568
        %v2573 = vmul.u32 %v2567, %v2569
        %v2574 = vshll.u32 %v2571, 16
        %v2575 = vshrl.u32 %v2571, 16
        %v2576 = vshll.u32 %v2572, 16
        %v2577 = vshrl.u32 %v2572, 16
        %vm2578 = vc.u32 %v2570, %v2574
        %v2579 = vsel %vm2578, 1, 0
        %v2580 = vadd.s32 %v2570, %v2574
        %v2581 = vadd.s32 %v2573, %v2579
        %vm2582 = vc.u32 %v2580, %v2576
        %v2583 = vsel %vm2582, 1, 0
        %v2584 = vadd.s32 %v2580, %v2576
        %v2585 = vadd.s32 %v2581, %v2583
        %v2586 = vadd.s32 %v2585, %v2575
        %v2587 = vadd.s32 %v2586, %v2577
        %v2588 = vand.u32 %v2565, 65535
        %v2589 = vshrl.u32 %v2565, 16
        %v2590 = vand.u32 %v2560, 65535
        %v2591 = vshrl.u32 %v2560, 16
        %v2592 = vmul.u32 %v2588, %v2590
        %v2593 = vmul.u32 %v2588, %v2591
        %v2594 = vmul.u32 %v2589, %v2590
        %v2595 = vmul.u32 %v2589, %v2591
        %v2596 = vshll.u32 %v2593, 16
        %v2597 = vshrl.u32 %v2593, 16
        %v2598 = vshll.u32 %v2594, 16
        %v2599 = vshrl.u32 %v2594, 16
        %vm2600 = vc.u32 %v2592, %v2596
        %v2601 = vsel %vm2600, 1, 0
        %v2602 = vadd.s32 %v2592, %v2596
        %v2603 = vadd.s32 %v2595, %v2601
        %vm2604 = vc.u32 %v2602, %v2598
        %v2605 = vsel %vm2604, 1, 0
        %v2606 = vadd.s32 %v2602, %v2598
        %v2607 = vadd.s32 %v2603, %v2605
        %v2608 = vadd.s32 %v2607, %v2597
        %v2609 = vadd.s32 %v2608, %v2599
        %v2610 = vmul.u32 %v2565, %v2556
        %v2611 = vadd.s32 %v2587, %v2606
        %vm2612 = vc.u32 %v2587, %v2606
        %v2613 = vadd.s32 %v2609, 1
        %v2614 = vsel %vm2612, %v2613, %v2609
        %v2615 = vadd.s32 %v2610, %v2614
        %v2616 = vadd.s32 %v2615, 536870912
        %v2617 = vshrl.u32 %v2616, 30
        %v2618 = vshll.u32 %v2617, 30
        %v2619 = vsub.s32 %v2615, %v2618
        %vm2620 = vcmp.lt.s32.totalorder %v2619, 0
        %v2621 = vsub.s32 0, %v2619
        %v2622 = vsel %vm2620, %v2621, %v2619
        %v2623 = vclz %v2622
        %v2624 = vsub.s32 %v2623, 2
        %vm2625 = vcmp.gt.s32.totalorder 0, %v2624
        %v2626 = vsel %vm2625, 0, %v2624
        %v2627 = vsub.s32 32, %v2626
        %v2628 = vshll.u32 %v2619, %v2626
        %v2629 = vshrl.u32 %v2611, %v2627
        %v2630 = vor.u32 %v2628, %v2629
        %v2631 = vsub.s32 4294967266, %v2626
        %v2632 = vadd.s32 %v2631, 127
        %v2633 = vshll.u32 %v2632, 23
        %v2634 = vor.u32 4788187, %v2633
        %v2635 = vand.u32 2147483647, %v2634
        %v2637 = vcvt.s32.f32 %v2630
        %v2638 = vmul.f32 %v2637, %v2635
        %v2639 = vxor.u32 %v2638, 2147483648
        %v2640 = vsel %vm2519, %v2639, %v2638
        %v2641 = vsub.s32 4, %v2617
        %v2642 = vsel %vm2519, %v2641, %v2617
        %v2643 = vsel %vm2518, %v1585, %v2640
        %v2644 = vsel %vm2518, 0, %v2642
        %v2645 = vmul.f32 %v2643, %v2643
        %v2646 = vmul.f32 %v2645, -0.001358992
        %v2647 = vadd.f32 %v2646, 0.041655596
        %v2648 = vmul.f32 %v2645, %v2647
        %v2649 = vadd.f32 %v2648, -0.4999988
        %v2650 = vmul.f32 %v2645, %v2649
        %v2651 = vadd.f32 1.0, %v2650
        %v2652 = vmul.f32 %v2643, %v2643
        %v2653 = vmul.f32 %v2652, -0.00019511016
        %v2654 = vadd.f32 %v2653, 0.008332121
        %v2655 = vmul.f32 %v2652, %v2654
        %v2656 = vadd.f32 %v2655, -0.16666654
        %v2657 = vmul.f32 %v2652, %v2656
        %v2658 = vadd.f32 %v2657, 1.0
        %v2659 = vmul.f32 %v2658, %v2643
        %vm2660 = vweird.f32 %v1585
        %v2661 = vadd.s32 %v2644, 3
        %v2662 = vand.u32 %v2661, 3
        %vm2663 = vcmp.lt.s32.totalorder %v2662, 2
        %vm2664 = vcmp.eq.s32.totalorder %v2662, 0
        %v2665 = vxor.u32 %v2659, 2147483648
        %v2666 = vsel %vm2664, %v2651, %v2665
        %vm2667 = vcmp.eq.s32.totalorder %v2662, 2
        %v2668 = vxor.u32 %v2651, 2147483648
        %v2669 = vsel %vm2667, %v2668, %v2659
        %v2670 = vsel %vm2663, %v2666, %v2669
        %v2671 = vsel %vm2660, nan, %v2670
        %v2672 = vand.u32 2147483647, %v1586
        %vm2673 = vcmp.le.f32.partialorder %v2672, 0.7853982
        %vm2674 = vcmp.lt.s32.totalorder %v1586, 0
        %v2675 = vand.u32 %v1586, 2139095040
        %v2676 = vshrl.u32 %v2675, 23
        %v2677 = vsub.s32 %v2676, 127
        %v2678 = vand.u32 2147483647, %v1586
        %v2679 = vand.u32 %v2678, 8388607
        %v2680 = vor.u32 %v2679, 8388608
        %v2681 = vsub.s32 0, %v2680
        %v2682 = vadd.s32 %v2677, 1
        %vm2683 = vcmp.gt.s32.totalorder %v2682, 0
        %v2684 = vsel %vm2683, %v2682, 0
        %v2685 = vshrl.u32 %v2684, 5
        %v2686 = vand.u32 %v2684, 31
        %v2687 = vsub.s32 32, %v2686
        %v2688 = vshrl.u32 683565275, %v2687
        %v2689 = vshll.u32 683565275, %v2686
        %v2690 = vshrl.u32 2475754826, %v2687
        %v2691 = vor.u32 %v2689, %v2690
        %v2692 = vshll.u32 2475754826, %v2686
        %v2693 = vshrl.u32 2131351028, %v2687
        %v2694 = vor.u32 %v2692, %v2693
        %v2695 = vshll.u32 2131351028, %v2686
        %v2696 = vshrl.u32 2102212464, %v2687
        %v2697 = vor.u32 %v2695, %v2696
        %v2698 = vshll.u32 2102212464, %v2686
        %v2699 = vshrl.u32 920167782, %v2687
        %v2700 = vor.u32 %v2698, %v2699
        %v2701 = vshll.u32 920167782, %v2686
        %v2702 = vshrl.u32 1326507024, %v2687
        %v2703 = vor.u32 %v2701, %v2702
        %vm2704 = vcmp.lt.s32.totalorder %v2685, 1
        %vm2705 = vcmp.lt.s32.totalorder %v2685, 2
        %vm2706 = vcmp.lt.s32.totalorder %v2685, 3
        %vm2707 = vcmp.lt.s32.totalorder %v2685, 4
        %v2708 = vsel %vm2704, %v2688, %v2691
        %v2709 = vsel %vm2707, %v2697, 2102212464
        %v2710 = vsel %vm2706, %v2694, %v2709
        %v2711 = vsel %vm2705, %v2708, %v2710
        %v2712 = vsel %vm2704, %v2691, %v2694
        %v2713 = vsel %vm2707, %v2700, 920167782
        %v2714 = vsel %vm2706, %v2697, %v2713
        %v2715 = vsel %vm2705, %v2712, %v2714
        %v2716 = vsel %vm2704, %v2694, %v2697
        %v2717 = vsel %vm2707, %v2703, 1326507024
        %v2718 = vsel %vm2706, %v2700, %v2717
        %v2719 = vsel %vm2705, %v2716, %v2718
        %v2720 = vshll.u32 %v2680, 8
        %v2721 = vand.u32 %v2720, 65535
        %v2722 = vshrl.u32 %v2720, 16
        %v2723 = vand.u32 %v2719, 65535
        %v2724 = vshrl.u32 %v2719, 16
        %v2725 = vmul.u32 %v2721, %v2723
        %v2726 = vmul.u32 %v2721, %v2724
        %v2727 = vmul.u32 %v2722, %v2723
        %v2728 = vmul.u32 %v2722, %v2724
        %v2729 = vshll.u32 %v2726, 16
        %v2730 = vshrl.u32 %v2726, 16
        %v2731 = vshll.u32 %v2727, 16
        %v2732 = vshrl.u32 %v2727, 16
        %vm2733 = vc.u32 %v2725, %v2729
        %v2734 = vsel %vm2733, 1, 0
        %v2735 = vadd.s32 %v2725, %v2729
        %v2736 = vadd.s32 %v2728, %v2734
        %vm2737 = vc.u32 %v2735, %v2731
        %v2738 = vsel %vm2737, 1, 0
        %v2739 = vadd.s32 %v2735, %v2731
        %v2740 = vadd.s32 %v2736, %v2738
        %v2741 = vadd.s32 %v2740, %v2730
        %v2742 = vadd.s32 %v2741, %v2732
        %v2743 = vand.u32 %v2720, 65535
        %v2744 = vshrl.u32 %v2720, 16
        %v2745 = vand.u32 %v2715, 65535
        %v2746 = vshrl.u32 %v2715, 16
        %v2747 = vmul.u32 %v2743, %v2745
        %v2748 = vmul.u32 %v2743, %v2746
        %v2749 = vmul.u32 %v2744, %v2745
        %v2750 = vmul.u32 %v2744, %v2746
        %v2751 = vshll.u32 %v2748, 16
        %v2752 = vshrl.u32 %v2748, 16
        %v2753 = vshll.u32 %v2749, 16
        %v2754 = vshrl.u32 %v2749, 16
        %vm2755 = vc.u32 %v2747, %v2751
        %v2756 = vsel %vm2755, 1, 0
        %v2757 = vadd.s32 %v2747, %v2751
        %v2758 = vadd.s32 %v2750, %v2756
        %vm2759 = vc.u32 %v2757, %v2753
        %v2760 = vsel %vm2759, 1, 0
        %v2761 = vadd.s32 %v2757, %v2753
        %v2762 = vadd.s32 %v2758, %v2760
        %v2763 = vadd.s32 %v2762, %v2752
        %v2764 = vadd.s32 %v2763, %v2754
        %v2765 = vmul.u32 %v2720, %v2711
        %v2766 = vadd.s32 %v2742, %v2761
        %vm2767 = vc.u32 %v2742, %v2761
        %v2768 = vadd.s32 %v2764, 1
        %v2769 = vsel %vm2767, %v2768, %v2764
        %v2770 = vadd.s32 %v2765, %v2769
        %v2771 = vadd.s32 %v2770, 536870912
        %v2772 = vshrl.u32 %v2771, 30
        %v2773 = vshll.u32 %v2772, 30
        %v2774 = vsub.s32 %v2770, %v2773
        %vm2775 = vcmp.lt.s32.totalorder %v2774, 0
        %v2776 = vsub.s32 0, %v2774
        %v2777 = vsel %vm2775, %v2776, %v2774
        %v2778 = vclz %v2777
        %v2779 = vsub.s32 %v2778, 2
        %vm2780 = vcmp.gt.s32.totalorder 0, %v2779
        %v2781 = vsel %vm2780, 0, %v2779
        %v2782 = vsub.s32 32, %v2781
        %v2783 = vshll.u32 %v2774, %v2781
        %v2784 = vshrl.u32 %v2766, %v2782
        %v2785 = vor.u32 %v2783, %v2784
        %v2786 = vsub.s32 4294967266, %v2781
        %v2787 = vadd.s32 %v2786, 127
        %v2788 = vshll.u32 %v2787, 23
        %v2789 = vor.u32 4788187, %v2788
        %v2790 = vand.u32 2147483647, %v2789
        %v2792 = vcvt.s32.f32 %v2785
        %v2793 = vmul.f32 %v2792, %v2790
        %v2794 = vxor.u32 %v2793, 2147483648
        %v2795 = vsel %vm2674, %v2794, %v2793
        %v2796 = vsub.s32 4, %v2772
        %v2797 = vsel %vm2674, %v2796, %v2772
        %v2798 = vsel %vm2673, %v1586, %v2795
        %v2799 = vsel %vm2673, 0, %v2797
        %v2800 = vmul.f32 %v2798, %v2798
        %v2801 = vmul.f32 %v2800, -0.001358992
        %v2802 = vadd.f32 %v2801, 0.041655596
        %v2803 = vmul.f32 %v2800, %v2802
        %v2804 = vadd.f32 %v2803, -0.4999988
        %v2805 = vmul.f32 %v2800, %v2804
        %v2806 = vadd.f32 1.0, %v2805
        %v2807 = vmul.f32 %v2798, %v2798
        %v2808 = vmul.f32 %v2807, -0.00019511016
        %v2809 = vadd.f32 %v2808, 0.008332121
        %v2810 = vmul.f32 %v2807, %v2809
        %v2811 = vadd.f32 %v2810, -0.16666654
        %v2812 = vmul.f32 %v2807, %v2811
        %v2813 = vadd.f32 %v2812, 1.0
        %v2814 = vmul.f32 %v2813, %v2798
        %vm2815 = vweird.f32 %v1586
        %v2816 = vadd.s32 %v2799, 3
        %v2817 = vand.u32 %v2816, 3
        %vm2818 = vcmp.lt.s32.totalorder %v2817, 2
        %vm2819 = vcmp.eq.s32.totalorder %v2817, 0
        %v2820 = vxor.u32 %v2814, 2147483648
        %v2821 = vsel %vm2819, %v2806, %v2820
        %vm2822 = vcmp.eq.s32.totalorder %v2817, 2
        %v2823 = vxor.u32 %v2806, 2147483648
        %v2824 = vsel %vm2822, %v2823, %v2814
        %v2825 = vsel %vm2818, %v2821, %v2824
        %v2826 = vsel %vm2815, nan, %v2825
        %2827 = vst [vmem:[%s204 + $0x40] sm:$0xff] %v1741
        %2828 = vst [vmem:[%s204 + $0x48] sm:$0xff] %v1896
        %2829 = vst [vmem:[%s204 + $0x50] sm:$0xff] %v2051
        %2830 = vst [vmem:[%s204 + $0x58] sm:$0xff] %v2206
        %2831 = vst [vmem:[%s204 + $0x60] sm:$0xff] %v2361
        %2832 = vst [vmem:[%s204 + $0x68] sm:$0xff] %v2516
        %2833 = vst [vmem:[%s204 + $0x70] sm:$0xff] %v2671
        %2834 = vst [vmem:[%s204 + $0x78] sm:$0xff] %v2826
        %s2835 = sand.u32 %s116, 1
        %s2836 = scalar_lea.sflag [#allocation3], %s2835
        %s2837 = sand.u32 %s116, 1
        %s2838 = smul.addr %s2837, 128
        %s2839 = scalar_lea.vmem [#allocation2], %s2838
        // Predicated region
        $region33: #{tpu_custom_call.1} parent=31 // pred_check
          %p2840 = pneg %p126
        $region34: #{tpu_custom_call.1} parent=31 // pred_check_branch
          %2842 = sbr.rel (%p2840) target = $region36
        $region35: #{tpu_custom_call.1} parent=31 // pred_region
          %2844 = vsyncadd %s2836, 0
          %s2845 = smul.addr %s21, 32
          %s2846 = sadd.s32 %s22, %s2845
          %s2847 = smul.addr %s2846, 8
          %s2848 = scalar_lea.hbm %s3, %s2847
          %s2849 = sshll.u32 %s2839, 4
          %s2850 = int_to_ptr.vmem [resolvable:$true] %s2849
          %s2851 = sshll.u32 %s2848, 4
          %s2852 = int_to_ptr.hbm [resolvable:$true] %s2851
          %2857 = dma.vmem_to_hbm [thread:$0]  %s2850, 2048, %s2852, %s2836, 128, 256, 8
        $region36: #{tpu_custom_call.1} parent=31 // pred_fallthru
          _
      $region32: #{tpu_custom_call.1} parent=5 // pred_fallthru
        _
      %p2858 = scmp.le.s32.totalorder 2, %s12
      // Predicated region
      $region37: #{tpu_custom_call.1} parent=5 // pred_check
        %p2859 = pneg %p2858
      $region38: #{tpu_custom_call.1} parent=5 // pred_check_branch
        %2861 = sbr.rel (%p2859) target = $region40
      $region39: #{tpu_custom_call.1} parent=5 // pred_region
        %s2862 = ssub.s32 %s12, 2
        // Predicated region
        $region41: #{tpu_custom_call.1} parent=39 // pred_check
          %p2863 = pneg %p132
        $region42: #{tpu_custom_call.1} parent=39 // pred_check_branch
          %2865 = sbr.rel (%p2863) target = $region44
        $region43: #{tpu_custom_call.1} parent=39 // pred_region
          %s2866 = sand.u32 %s117, 1
          %s2867 = scalar_lea.sflag [#allocation3], %s2866
          %s2868 = sand.u32 %s117, 1
          %s2869 = smul.addr %s2868, 128
          %s2870 = scalar_lea.vmem [#allocation2], %s2869
          %2872 = dma.done %s2867, 2048
        $region44: #{tpu_custom_call.1} parent=39 // pred_fallthru
          _
      $region40: #{tpu_custom_call.1} parent=5 // pred_fallthru
        _
    $region6: #{tpu_custom_call.1} parent=1 // loop_footer
      %s16 = sadd.s32 1, %s12
    $region7: #{tpu_custom_call.1} parent=1 // loop_footer_branch
      %11 = sbr.rel target = $region3
    $region8: #{tpu_custom_call.1} parent=1 // loop_exit
      _
    %2873 = vsyncpa [#allocation3], 1
    %s2874 = scalar_lea.sflag [#allocation3], 1
    %2875 = vsyncpa %s2874, 1

</llo_original>
